<compile_context>
chip_gen: v7x
topology: tpu7x:2x2x1
jax: 0.10.0
libtpu: 0.0.40
codegen_flags: <defaults>
</compile_context>

<pallas_src>
import functools

import jax
import jax.numpy as jnp
from jax.experimental import pallas as pl
from jax.experimental.pallas import tpu as pltpu


def _round_up(x, m):
    return ((x + m - 1) // m) * m


def fused_extractor_head_kernel(x_ref, wc_ref, bc_ref, wf_ref, bf_ref, o_ref,
                                xpad_ref, col_ref, *, H, W, Cin, B):
    """Fully fused ext+head for B images per grid step.

    x_ref   : (B, H, W, Cin)      unpadded NHWC images (f32)
    wc_ref  : (9*Cin, Cfp)        conv weight, rows = (kh,kw,cin), bf16
    bc_ref  : (1, Cfp)            conv bias (zero-padded, f32)
    wf_ref  : (Cfp, Kp)           head weight with 1/(H*W) folded in (f32)
    bf_ref  : (1, Kp)             head bias (zero-padded, f32)
    o_ref   : (1, B, Kp)          logits (lane-dense; cols >= K are exactly 0)
    xpad_ref: (B, H+2, W+2, Cin)  VMEM scratch, zero border = conv padding
    col_ref : (B*H*W, 9*Cin)      VMEM scratch, im2col patch matrix
    """
    HW = H * W
    Cfp = wc_ref.shape[-1]

    # Conv "SAME" padding done in VMEM: zero the scratch (cheap, few KiB) and
    # write this block's images at offset (1, 1).  Unconditional zeroing keeps
    # this correct under megacore grid sharding (no reliance on program_id==0).
    xpad_ref[...] = jnp.zeros_like(xpad_ref)
    xpad_ref[:, 1:H + 1, 1:W + 1, :] = x_ref[...]

    # In-kernel im2col: copy the 9 shifted slices once into the patch matrix.
    for t in range(9):
        kh, kw = t // 3, t % 3
        col_ref[:, t * Cin:(t + 1) * Cin] = (
            xpad_ref[:, kh:kh + H, kw:kw + W, :].reshape(B * HW, Cin))

    # Single MXU matmul, contraction K = 9*Cin, bf16 operands / f32 accumulate.
    acc = jnp.dot(col_ref[...].astype(jnp.bfloat16), wc_ref[...],
                  preferred_element_type=jnp.float32)            # (B*HW, Cfp)
    feat = jnp.maximum(acc + bc_ref[...], 0.0)                   # bias + ReLU

    # Global average pool: sum over HW; the 1/(H*W) scale is folded into wf.
    pooled = jnp.sum(feat.reshape(B, HW, Cfp), axis=1)           # (B, Cfp)

    # Linear head (tiny M=B matmul; kept f32 for accuracy — bf16 buys nothing).
    o_ref[0] = (jnp.dot(pooled, wf_ref[...],
                        preferred_element_type=jnp.float32) + bf_ref[...])


def prepare_params(conv_w, conv_b, fc_w, fc_b, H, W):
    """Hoisted, call-once weight re-layout + padding + bf16 cast.

    conv_w: (Cf, Cin, 3, 3) OIHW ; conv_b: (Cf,)
    fc_w  : (K, Cf)               ; fc_b  : (K,)
    """
    Cf, Cin = conv_w.shape[0], conv_w.shape[1]
    K = fc_w.shape[0]
    Cfp = _round_up(max(Cf, 128), 128)
    Kp = _round_up(max(K, 128), 128)

    # (Cf, Cin, 3, 3) -> (3, 3, Cin, Cf) -> (9*Cin, Cf); pad Cf -> Cfp; bf16
    # for the MXU (padding columns are zero, hence inert through bias/ReLU).
    wc = jnp.transpose(conv_w, (2, 3, 1, 0)).reshape(9 * Cin, Cf)
    wc = jnp.pad(wc, ((0, 0), (0, Cfp - Cf))).astype(jnp.bfloat16)
    bc = jnp.pad(conv_b, (0, Cfp - Cf)).reshape(1, Cfp)

    # PyTorch Linear: y = x @ fc_w.T + fc_b.  Fold the 1/(H*W) average-pool
    # scale into the weight (the kernel only sum-pools); bias is NOT scaled.
    wf = jnp.pad(fc_w.T, ((0, Cfp - Cf), (0, Kp - K))) * (1.0 / float(H * W))
    bf = jnp.pad(fc_b, (0, Kp - K)).reshape(1, Kp)
    return wc, bc, wf, bf, K


@functools.partial(jax.jit, static_argnames=("num_classes",))
def extractor_head_forward(x_nchw, wc, bc, wf, bf, *, num_classes):
    """x_nchw: (N, Cin, H, W) float32 -> logits (N, num_classes) float32."""
    N, Cin, H, W = x_nchw.shape
    Cfp = wc.shape[-1]
    Kp = wf.shape[-1]

    # Batch-block size: amortize per-grid-step overhead (up to 8 imgs/step)
    # while keeping >= 2 grid steps so both v7x TensorCores get work.
    B = 1 if N <= 1 else min(8, max(1, N // 2))
    G = pl.cdiv(N, B)
    Npad = G * B

    # Layout glue only: NCHW -> NHWC (channels onto lanes).  The conv zero
    # padding is done inside the kernel, so no second HBM copy of x is made.
    x_nhwc = jnp.transpose(x_nchw, (0, 2, 3, 1))
    if Npad != N:
        x_nhwc = jnp.pad(x_nhwc, ((0, Npad - N), (0, 0), (0, 0), (0, 0)))

    kernel = functools.partial(fused_extractor_head_kernel,
                               H=H, W=W, Cin=Cin, B=B)
    out = pl.pallas_call(
        kernel,
        out_shape=jax.ShapeDtypeStruct((G, B, Kp), jnp.float32),
        grid_spec=pltpu.PrefetchScalarGridSpec(
            num_scalar_prefetch=0,
            grid=(G,),
            in_specs=[
                pl.BlockSpec((B, H, W, Cin), lambda n: (n, 0, 0, 0)),
                pl.BlockSpec((9 * Cin, Cfp), lambda n: (0, 0)),
                pl.BlockSpec((1, Cfp), lambda n: (0, 0)),
                pl.BlockSpec((Cfp, Kp), lambda n: (0, 0)),
                pl.BlockSpec((1, Kp), lambda n: (0, 0)),
            ],
            out_specs=pl.BlockSpec((1, B, Kp), lambda n: (n, 0, 0)),
            scratch_shapes=[
                pltpu.VMEM((B, H + 2, W + 2, Cin), jnp.float32),   # padded img
                pltpu.VMEM((B * H * W, 9 * Cin), jnp.float32),     # im2col
            ],
        ),
        compiler_params=pltpu.CompilerParams(
            dimension_semantics=("parallel",),
            vmem_limit_bytes=32 * 1024 * 1024),
    )(x_nhwc, wc, bc, wf, bf)
    return out.reshape(Npad, Kp)[:N, :num_classes]


def reference_forward(x_nchw, conv_w, conv_b, fc_w, fc_b):
    """Pure-JAX f32 reference (mirrors the PyTorch ops exactly)."""
    y = jax.lax.conv_general_dilated(
        x_nchw, conv_w, window_strides=(1, 1), padding="SAME",
        dimension_numbers=("NCHW", "OIHW", "NCHW"))
    y = y + conv_b[None, :, None, None]
    y = jnp.maximum(y, 0.0)                                      # ReLU
    pooled = jnp.mean(y, axis=(2, 3))                            # AdaptiveAvgPool2d(1)
    return pooled @ fc_w.T + fc_b                                # Linear


if __name__ == "__main__":
    N, Cin, H, W = 2, 4, 16, 16
    Cf, K = 32, 4                                                # feature width, classes

    key = jax.random.PRNGKey(0)
    k1, k2, k3, k4, k5 = jax.random.split(key, 5)
    x = jax.random.normal(k1, (N, Cin, H, W), jnp.float32)
    conv_w = 0.1 * jax.random.normal(k2, (Cf, Cin, 3, 3), jnp.float32)
    conv_b = 0.1 * jax.random.normal(k3, (Cf,), jnp.float32)
    fc_w = 0.1 * jax.random.normal(k4, (K, Cf), jnp.float32)
    fc_b = 0.1 * jax.random.normal(k5, (K,), jnp.float32)

    # Weight re-layout / padding / bf16 cast hoisted out of the per-call path.
    wc, bc, wf, bf, num_classes = prepare_params(conv_w, conv_b, fc_w, fc_b, H, W)

    out = extractor_head_forward(x, wc, bc, wf, bf, num_classes=num_classes)
    out = jax.block_until_ready(out)

    ref = reference_forward(x, conv_w, conv_b, fc_w, fc_b)
    assert out.shape == (N, K) and out.dtype == jnp.float32
    # bf16 conv operands (f32 accumulation) -> relax tolerance vs f32 reference.
    if not jnp.allclose(out, ref, atol=1e-2, rtol=1e-2):
        raise AssertionError(f"mismatch: max abs err = {jnp.max(jnp.abs(out - ref))}")

    print("KERNEL_OK")
</pallas_src>

<mosaic_0001>
module attributes {stable_mosaic.version = 11 : i64} {
  func.func @fused_extractor_head_kernel(%arg0: i32, %arg1: memref<1x16x16x4xf32, #tpu.memory_space<vmem>>, %arg2: memref<36x128xbf16, #tpu.memory_space<vmem>>, %arg3: memref<1x128xf32, #tpu.memory_space<vmem>>, %arg4: memref<128x128xf32, #tpu.memory_space<vmem>>, %arg5: memref<1x128xf32, #tpu.memory_space<vmem>>, %arg6: memref<1x1x128xf32, #tpu.memory_space<vmem>>, %arg7: memref<1x18x18x4xf32, #tpu.memory_space<vmem>>, %arg8: memref<256x36xf32, #tpu.memory_space<vmem>>) attributes {dimension_semantics = [#tpu.dimension_semantics<parallel>], iteration_bounds = array<i64: 2>, scalar_prefetch = 0 : i64, scratch_operands = 2 : i64, tpu.core_type = #tpu.core_type<tc>, window_params = [{transform_indices = @transform_0, window_bounds = array<i64: 1, 16, 16, 4>}, {pipeline_mode = #tpu.pipeline_mode<synchronous>, transform_indices = @transform_1, window_bounds = array<i64: 36, 128>}, {pipeline_mode = #tpu.pipeline_mode<synchronous>, transform_indices = @transform_2, window_bounds = array<i64: 1, 128>}, {pipeline_mode = #tpu.pipeline_mode<synchronous>, transform_indices = @transform_3, window_bounds = array<i64: 128, 128>}, {pipeline_mode = #tpu.pipeline_mode<synchronous>, transform_indices = @transform_4, window_bounds = array<i64: 1, 128>}, {transform_indices = @transform_5, window_bounds = array<i64: 1, 1, 128>}]} {
    %cst = arith.constant 0.000000e+00 : f32
    %0 = vector.broadcast %cst : f32 to vector<1x18x18x4xf32>
    %c0 = arith.constant 0 : index
    %c0_0 = arith.constant 0 : index
    %c0_1 = arith.constant 0 : index
    %c0_2 = arith.constant 0 : index
    %1 = vector.load %arg7[%c0, %c0_0, %c0_1, %c0_2] : memref<1x18x18x4xf32, #tpu.memory_space<vmem>>, vector<1x18x18x4xf32>
    tpu.vector_store %arg7[%c0, %c0_0, %c0_1, %c0_2], %0 {strides = array<i32>} : memref<1x18x18x4xf32, #tpu.memory_space<vmem>>, vector<1x18x18x4xf32>,
    %c0_3 = arith.constant 0 : index
    %c0_4 = arith.constant 0 : index
    %c0_5 = arith.constant 0 : index
    %c0_6 = arith.constant 0 : index
    %2 = vector.load %arg1[%c0_3, %c0_4, %c0_5, %c0_6] : memref<1x16x16x4xf32, #tpu.memory_space<vmem>>, vector<1x16x16x4xf32>
    %c0_7 = arith.constant 0 : index
    %c1 = arith.constant 1 : index
    %c1_8 = arith.constant 1 : index
    %c0_9 = arith.constant 0 : index
    %3 = vector.load %arg7[%c0_7, %c1, %c1_8, %c0_9] : memref<1x18x18x4xf32, #tpu.memory_space<vmem>>, vector<1x16x16x4xf32>
    tpu.vector_store %arg7[%c0_7, %c1, %c1_8, %c0_9], %2 {strides = array<i32>} : memref<1x18x18x4xf32, #tpu.memory_space<vmem>>, vector<1x16x16x4xf32>,
    %c0_10 = arith.constant 0 : index
    %c0_11 = arith.constant 0 : index
    %c0_12 = arith.constant 0 : index
    %c0_13 = arith.constant 0 : index
    %4 = vector.load %arg7[%c0_10, %c0_11, %c0_12, %c0_13] : memref<1x18x18x4xf32, #tpu.memory_space<vmem>>, vector<1x16x16x4xf32>
    %5 = vector.shape_cast %4 : vector<1x16x16x4xf32> to vector<256x4xf32>
    %c0_14 = arith.constant 0 : index
    %c0_15 = arith.constant 0 : index
    %6 = vector.load %arg8[%c0_14, %c0_15] : memref<256x36xf32, #tpu.memory_space<vmem>>, vector<256x4xf32>
    tpu.vector_store %arg8[%c0_14, %c0_15], %5 {strides = array<i32>} : memref<256x36xf32, #tpu.memory_space<vmem>>, vector<256x4xf32>,
    %c0_16 = arith.constant 0 : index
    %c0_17 = arith.constant 0 : index
    %c1_18 = arith.constant 1 : index
    %c0_19 = arith.constant 0 : index
    %7 = vector.load %arg7[%c0_16, %c0_17, %c1_18, %c0_19] : memref<1x18x18x4xf32, #tpu.memory_space<vmem>>, vector<1x16x16x4xf32>
    %8 = vector.shape_cast %7 : vector<1x16x16x4xf32> to vector<256x4xf32>
    %c0_20 = arith.constant 0 : index
    %c4 = arith.constant 4 : index
    %9 = vector.load %arg8[%c0_20, %c4] : memref<256x36xf32, #tpu.memory_space<vmem>>, vector<256x4xf32>
    tpu.vector_store %arg8[%c0_20, %c4], %8 {strides = array<i32>} : memref<256x36xf32, #tpu.memory_space<vmem>>, vector<256x4xf32>,
    %c0_21 = arith.constant 0 : index
    %c0_22 = arith.constant 0 : index
    %c2 = arith.constant 2 : index
    %c0_23 = arith.constant 0 : index
    %10 = vector.load %arg7[%c0_21, %c0_22, %c2, %c0_23] : memref<1x18x18x4xf32, #tpu.memory_space<vmem>>, vector<1x16x16x4xf32>
    %11 = vector.shape_cast %10 : vector<1x16x16x4xf32> to vector<256x4xf32>
    %c0_24 = arith.constant 0 : index
    %c8 = arith.constant 8 : index
    %12 = vector.load %arg8[%c0_24, %c8] : memref<256x36xf32, #tpu.memory_space<vmem>>, vector<256x4xf32>
    tpu.vector_store %arg8[%c0_24, %c8], %11 {strides = array<i32>} : memref<256x36xf32, #tpu.memory_space<vmem>>, vector<256x4xf32>,
    %c0_25 = arith.constant 0 : index
    %c1_26 = arith.constant 1 : index
    %c0_27 = arith.constant 0 : index
    %c0_28 = arith.constant 0 : index
    %13 = vector.load %arg7[%c0_25, %c1_26, %c0_27, %c0_28] : memref<1x18x18x4xf32, #tpu.memory_space<vmem>>, vector<1x16x16x4xf32>
    %14 = vector.shape_cast %13 : vector<1x16x16x4xf32> to vector<256x4xf32>
    %c0_29 = arith.constant 0 : index
    %c12 = arith.constant 12 : index
    %15 = vector.load %arg8[%c0_29, %c12] : memref<256x36xf32, #tpu.memory_space<vmem>>, vector<256x4xf32>
    tpu.vector_store %arg8[%c0_29, %c12], %14 {strides = array<i32>} : memref<256x36xf32, #tpu.memory_space<vmem>>, vector<256x4xf32>,
    %c0_30 = arith.constant 0 : index
    %c1_31 = arith.constant 1 : index
    %c1_32 = arith.constant 1 : index
    %c0_33 = arith.constant 0 : index
    %16 = vector.load %arg7[%c0_30, %c1_31, %c1_32, %c0_33] : memref<1x18x18x4xf32, #tpu.memory_space<vmem>>, vector<1x16x16x4xf32>
    %17 = vector.shape_cast %16 : vector<1x16x16x4xf32> to vector<256x4xf32>
    %c0_34 = arith.constant 0 : index
    %c16 = arith.constant 16 : index
    %18 = vector.load %arg8[%c0_34, %c16] : memref<256x36xf32, #tpu.memory_space<vmem>>, vector<256x4xf32>
    tpu.vector_store %arg8[%c0_34, %c16], %17 {strides = array<i32>} : memref<256x36xf32, #tpu.memory_space<vmem>>, vector<256x4xf32>,
    %c0_35 = arith.constant 0 : index
    %c1_36 = arith.constant 1 : index
    %c2_37 = arith.constant 2 : index
    %c0_38 = arith.constant 0 : index
    %19 = vector.load %arg7[%c0_35, %c1_36, %c2_37, %c0_38] : memref<1x18x18x4xf32, #tpu.memory_space<vmem>>, vector<1x16x16x4xf32>
    %20 = vector.shape_cast %19 : vector<1x16x16x4xf32> to vector<256x4xf32>
    %c0_39 = arith.constant 0 : index
    %c20 = arith.constant 20 : index
    %21 = vector.load %arg8[%c0_39, %c20] : memref<256x36xf32, #tpu.memory_space<vmem>>, vector<256x4xf32>
    tpu.vector_store %arg8[%c0_39, %c20], %20 {strides = array<i32>} : memref<256x36xf32, #tpu.memory_space<vmem>>, vector<256x4xf32>,
    %c0_40 = arith.constant 0 : index
    %c2_41 = arith.constant 2 : index
    %c0_42 = arith.constant 0 : index
    %c0_43 = arith.constant 0 : index
    %22 = vector.load %arg7[%c0_40, %c2_41, %c0_42, %c0_43] : memref<1x18x18x4xf32, #tpu.memory_space<vmem>>, vector<1x16x16x4xf32>
    %23 = vector.shape_cast %22 : vector<1x16x16x4xf32> to vector<256x4xf32>
    %c0_44 = arith.constant 0 : index
    %c24 = arith.constant 24 : index
    %24 = vector.load %arg8[%c0_44, %c24] : memref<256x36xf32, #tpu.memory_space<vmem>>, vector<256x4xf32>
    tpu.vector_store %arg8[%c0_44, %c24], %23 {strides = array<i32>} : memref<256x36xf32, #tpu.memory_space<vmem>>, vector<256x4xf32>,
    %c0_45 = arith.constant 0 : index
    %c2_46 = arith.constant 2 : index
    %c1_47 = arith.constant 1 : index
    %c0_48 = arith.constant 0 : index
    %25 = vector.load %arg7[%c0_45, %c2_46, %c1_47, %c0_48] : memref<1x18x18x4xf32, #tpu.memory_space<vmem>>, vector<1x16x16x4xf32>
    %26 = vector.shape_cast %25 : vector<1x16x16x4xf32> to vector<256x4xf32>
    %c0_49 = arith.constant 0 : index
    %c28 = arith.constant 28 : index
    %27 = vector.load %arg8[%c0_49, %c28] : memref<256x36xf32, #tpu.memory_space<vmem>>, vector<256x4xf32>
    tpu.vector_store %arg8[%c0_49, %c28], %26 {strides = array<i32>} : memref<256x36xf32, #tpu.memory_space<vmem>>, vector<256x4xf32>,
    %c0_50 = arith.constant 0 : index
    %c2_51 = arith.constant 2 : index
    %c2_52 = arith.constant 2 : index
    %c0_53 = arith.constant 0 : index
    %28 = vector.load %arg7[%c0_50, %c2_51, %c2_52, %c0_53] : memref<1x18x18x4xf32, #tpu.memory_space<vmem>>, vector<1x16x16x4xf32>
    %29 = vector.shape_cast %28 : vector<1x16x16x4xf32> to vector<256x4xf32>
    %c0_54 = arith.constant 0 : index
    %c32 = arith.constant 32 : index
    %30 = vector.load %arg8[%c0_54, %c32] : memref<256x36xf32, #tpu.memory_space<vmem>>, vector<256x4xf32>
    tpu.vector_store %arg8[%c0_54, %c32], %29 {strides = array<i32>} : memref<256x36xf32, #tpu.memory_space<vmem>>, vector<256x4xf32>,
    %c0_55 = arith.constant 0 : index
    %c0_56 = arith.constant 0 : index
    %31 = vector.load %arg8[%c0_55, %c0_56] : memref<256x36xf32, #tpu.memory_space<vmem>>, vector<256x36xf32>
    %32 = arith.truncf %31 : vector<256x36xf32> to vector<256x36xbf16>
    %c0_57 = arith.constant 0 : index
    %c0_58 = arith.constant 0 : index
    %33 = vector.load %arg2[%c0_57, %c0_58] : memref<36x128xbf16, #tpu.memory_space<vmem>>, vector<36x128xbf16>
    %cst_59 = arith.constant dense<0.000000e+00> : vector<256x128xf32>
    %34 = tpu.matmul %32, %33, %cst_59 {dimension_numbers = #tpu.dot_dimension_numbers<[1], [0], [0], [1], [0, 0, 1, 1], [], []>} : vector<256x36xbf16>, vector<36x128xbf16>, vector<256x128xf32> -> vector<256x128xf32>
    %c0_60 = arith.constant 0 : index
    %c0_61 = arith.constant 0 : index
    %35 = vector.load %arg3[%c0_60, %c0_61] : memref<1x128xf32, #tpu.memory_space<vmem>>, vector<1x128xf32>
    %36 = vector.broadcast %35 : vector<1x128xf32> to vector<256x128xf32>
    %37 = arith.addf %34, %36 : vector<256x128xf32>
    %cst_62 = arith.constant 0.000000e+00 : f32
    %38 = vector.broadcast %cst_62 : f32 to vector<256x128xf32>
    %39 = arith.maximumf %37, %38 : vector<256x128xf32>
    %40 = vector.shape_cast %39 : vector<256x128xf32> to vector<1x256x128xf32>
    %cst_63 = arith.constant dense<0.000000e+00> : vector<1x128xf32>
    %41 = vector.multi_reduction <add>, %40, %cst_63 [1] : vector<1x256x128xf32> to vector<1x128xf32>
    %c0_64 = arith.constant 0 : index
    %c0_65 = arith.constant 0 : index
    %42 = vector.load %arg4[%c0_64, %c0_65] : memref<128x128xf32, #tpu.memory_space<vmem>>, vector<128x128xf32>
    %cst_66 = arith.constant dense<0.000000e+00> : vector<1x128xf32>
    %43 = tpu.matmul %41, %42, %cst_66 {dimension_numbers = #tpu.dot_dimension_numbers<[1], [0], [0], [1], [0, 0, 1, 1], [], []>} : vector<1x128xf32>, vector<128x128xf32>, vector<1x128xf32> -> vector<1x128xf32>
    %c0_67 = arith.constant 0 : index
    %c0_68 = arith.constant 0 : index
    %44 = vector.load %arg5[%c0_67, %c0_68] : memref<1x128xf32, #tpu.memory_space<vmem>>, vector<1x128xf32>
    %45 = arith.addf %43, %44 : vector<1x128xf32>
    %c0_69 = arith.constant 0 : index
    %c0_70 = arith.constant 0 : index
    %c0_71 = arith.constant 0 : index
    %46 = vector.load %arg6[%c0_69, %c0_70, %c0_71] : memref<1x1x128xf32, #tpu.memory_space<vmem>>, vector<1x1x128xf32>
    %47 = vector.shape_cast %46 : vector<1x1x128xf32> to vector<1x128xf32>
    %48 = vector.shape_cast %45 : vector<1x128xf32> to vector<1x1x128xf32>
    tpu.vector_store %arg6[%c0_69, %c0_70, %c0_71], %48 {strides = array<i32>} : memref<1x1x128xf32, #tpu.memory_space<vmem>>, vector<1x1x128xf32>,
    return
  }
  func.func @transform_0(%arg0: i32) -> (i32, i32, i32, i32) {
    %c0_i32 = arith.constant 0 : i32
    %c0_i32_0 = arith.constant 0 : i32
    %c0_i32_1 = arith.constant 0 : i32
    %c0_i32_2 = arith.constant 0 : i32
    return %arg0, %c0_i32, %c0_i32_0, %c0_i32_1 : i32, i32, i32, i32
  }
  func.func @transform_1(%arg0: i32) -> (i32, i32) {
    %c0_i32 = arith.constant 0 : i32
    %c0_i32_0 = arith.constant 0 : i32
    %c0_i32_1 = arith.constant 0 : i32
    return %c0_i32, %c0_i32_0 : i32, i32
  }
  func.func @transform_2(%arg0: i32) -> (i32, i32) {
    %c0_i32 = arith.constant 0 : i32
    %c0_i32_0 = arith.constant 0 : i32
    %c0_i32_1 = arith.constant 0 : i32
    return %c0_i32, %c0_i32_0 : i32, i32
  }
  func.func @transform_3(%arg0: i32) -> (i32, i32) {
    %c0_i32 = arith.constant 0 : i32
    %c0_i32_0 = arith.constant 0 : i32
    %c0_i32_1 = arith.constant 0 : i32
    return %c0_i32, %c0_i32_0 : i32, i32
  }
  func.func @transform_4(%arg0: i32) -> (i32, i32) {
    %c0_i32 = arith.constant 0 : i32
    %c0_i32_0 = arith.constant 0 : i32
    %c0_i32_1 = arith.constant 0 : i32
    return %c0_i32, %c0_i32_0 : i32, i32
  }
  func.func @transform_5(%arg0: i32) -> (i32, i32, i32) {
    %c0_i32 = arith.constant 0 : i32
    %c0_i32_0 = arith.constant 0 : i32
    %c0_i32_1 = arith.constant 0 : i32
    return %arg0, %c0_i32, %c0_i32_0 : i32, i32, i32
  }
}

</mosaic_0001>

<llo_original>
// kernel: extractor_head_forward.1
$region0: #{extractor_head_forward.1}
  #allocation0 [shape = 'u32[]', space=smem, size = 0x4, offset = 0x4, fixed_abs, tag = 'smem constant byte address 0x4 - core index']
  #allocation1 [shape = 'u32[144,128]{1,0:T(1,128)}', space=vmem, size = 0x12000, scoped, tag = 'internal scratch']
  #allocation2 [shape = 'f32[1,18,18,4]{3,2,1,0:T(8,128)}', space=vmem, size = 0x36000, scoped, tag = 'scratch operand']
  #allocation3 [shape = 'f32[256,36]{1,0:T(8,128)}', space=vmem, size = 0x20000, scoped, tag = 'scratch operand']
  %s0 = inlined_call_operand.vmem [shape: f32[2,16,16,4], index: 0, kind: input, shape index: {}]
  %s1 = inlined_call_operand.vmem [shape: bf16[36,128], index: 1, kind: input, shape index: {}]
  %s2 = inlined_call_operand.vmem [shape: f32[1,128], index: 2, kind: input, shape index: {}]
  %s3 = inlined_call_operand.vmem [shape: f32[128,128], index: 3, kind: input, shape index: {}]
  %s4 = inlined_call_operand.vmem [shape: f32[1,128], index: 4, kind: input, shape index: {}]
  %s5 = inlined_call_operand.hbm [shape: f32[2,1,128], index: 5, kind: output, shape index: {}]
  %s6 = sld [smem:[#allocation0]]
  $region53: #{extractor_head_forward.1} parent=0
    _
  %s8 = ssub.s32 1, %s6
  %s9 = scalar_select 0, %s8, %s6
  $region1: #{extractor_head_forward.1} parent=0
    #allocation4 [shape = 'u8[1024]{0}', space=vmem, size = 0x400, scoped, tag = 'output window, operand 0']
    #allocation5 [shape = 's32[2]{0}', space=sflag, size = 0x8, scoped, tag = 'scoped memory for extractor_head_forward.1']
    %10 = vsyncpa [#allocation5], 0
    %s11 = scalar_lea.sflag [#allocation5], 1
    %12 = vsyncpa %s11, 0
    loop: start=0, step=1, limit=4
    $region2: #{extractor_head_forward.1} parent=1 // loop_pre_header
      _
    $region3: #{extractor_head_forward.1} parent=1 // loop_header
      %s14 = sphi 0, %s18
      %p15 = scmp.ge.s32.totalorder %s14, 4
      %s24 = sphi 0, %s26
      %s27 = sphi 0, %s24
      %s28 = sphi 0, %s27
      %s44 = sphi 0, %s28
      %s48 = sphi 0, %s48
      %s50 = sphi 0, %s48
      %s51 = sphi 0, %s50
      %s65 = sphi 0, %s51
      %s69 = sphi 0, %s69
      %s71 = sphi 0, %s69
      %s72 = sphi 0, %s71
      %s86 = sphi 0, %s72
      %s90 = sphi 0, %s90
      %s92 = sphi 0, %s90
      %s93 = sphi 0, %s92
      %s107 = sphi 0, %s93
      %s111 = sphi 0, %s111
      %s113 = sphi 0, %s111
      %s114 = sphi 0, %s113
      %s128 = sphi 0, %s114
      %s134 = sphi 0, %s136
      %s137 = sphi 0, %s134
      %s138 = sphi 0, %s137
      %s154 = sphi 0, %s138
    $region4: #{extractor_head_forward.1} parent=1 // loop_header_branch
      %17 = sbr.rel (%p15) target = $region8
    $region5: #{extractor_head_forward.1} parent=1 // loop_body
      %s19 = ssub.s32 %s14, 1
      %s20 = ssub.s32 %s14, 2
      %s21 = sadd.s32 %s14, 1
      %s22 = ssub.s32 %s14, %s21
      %p23 = scmp.eq.s32.totalorder %s22, 0
      %s25 = sadd.s32 %s24, 1
      %s26 = scalar_select %p23, %s24, %s25
      %p29 = pneg %p23
      %p30 = scmp.eq.s32.totalorder %s14, 1
      %p31 = por %p29, %p30
      %p32 = scmp.ne.s32.totalorder %s24, %s27
      %p33 = scmp.eq.s32.totalorder %s14, 0
      %p34 = por %p32, %p33
      %p35 = scmp.ne.s32.totalorder %s24, %s27
      %p36 = scmp.eq.s32.totalorder %s19, 1
      %p37 = por %p35, %p36
      %p38 = scmp.ne.s32.totalorder %s27, %s28
      %p39 = scmp.eq.s32.totalorder %s19, 0
      %p40 = por %p38, %p39
      %p41 = scmp.ne.s32.totalorder %s27, %s28
      %p42 = scmp.eq.s32.totalorder %s20, 1
      %p43 = por %p41, %p42
      %p45 = scmp.ne.s32.totalorder %s28, %s44
      %p46 = scmp.eq.s32.totalorder %s20, 0
      %p47 = por %p45, %p46
      %s49 = sadd.s32 %s48, 1
      %p52 = scmp.eq.s32.totalorder %s14, 1
      %p53 = scmp.ne.s32.totalorder %s48, %s50
      %p54 = scmp.eq.s32.totalorder %s14, 0
      %p55 = por %p53, %p54
      %p56 = scmp.ne.s32.totalorder %s48, %s50
      %p57 = scmp.eq.s32.totalorder %s19, 1
      %p58 = por %p56, %p57
      %p59 = scmp.ne.s32.totalorder %s50, %s51
      %p60 = scmp.eq.s32.totalorder %s19, 0
      %p61 = por %p59, %p60
      %p62 = scmp.ne.s32.totalorder %s50, %s51
      %p63 = scmp.eq.s32.totalorder %s20, 1
      %p64 = por %p62, %p63
      %p66 = scmp.ne.s32.totalorder %s51, %s65
      %p67 = scmp.eq.s32.totalorder %s20, 0
      %p68 = por %p66, %p67
      %s70 = sadd.s32 %s69, 1
      %p73 = scmp.eq.s32.totalorder %s14, 1
      %p74 = scmp.ne.s32.totalorder %s69, %s71
      %p75 = scmp.eq.s32.totalorder %s14, 0
      %p76 = por %p74, %p75
      %p77 = scmp.ne.s32.totalorder %s69, %s71
      %p78 = scmp.eq.s32.totalorder %s19, 1
      %p79 = por %p77, %p78
      %p80 = scmp.ne.s32.totalorder %s71, %s72
      %p81 = scmp.eq.s32.totalorder %s19, 0
      %p82 = por %p80, %p81
      %p83 = scmp.ne.s32.totalorder %s71, %s72
      %p84 = scmp.eq.s32.totalorder %s20, 1
      %p85 = por %p83, %p84
      %p87 = scmp.ne.s32.totalorder %s72, %s86
      %p88 = scmp.eq.s32.totalorder %s20, 0
      %p89 = por %p87, %p88
      %s91 = sadd.s32 %s90, 1
      %p94 = scmp.eq.s32.totalorder %s14, 1
      %p95 = scmp.ne.s32.totalorder %s90, %s92
      %p96 = scmp.eq.s32.totalorder %s14, 0
      %p97 = por %p95, %p96
      %p98 = scmp.ne.s32.totalorder %s90, %s92
      %p99 = scmp.eq.s32.totalorder %s19, 1
      %p100 = por %p98, %p99
      %p101 = scmp.ne.s32.totalorder %s92, %s93
      %p102 = scmp.eq.s32.totalorder %s19, 0
      %p103 = por %p101, %p102
      %p104 = scmp.ne.s32.totalorder %s92, %s93
      %p105 = scmp.eq.s32.totalorder %s20, 1
      %p106 = por %p104, %p105
      %p108 = scmp.ne.s32.totalorder %s93, %s107
      %p109 = scmp.eq.s32.totalorder %s20, 0
      %p110 = por %p108, %p109
      %s112 = sadd.s32 %s111, 1
      %p115 = scmp.eq.s32.totalorder %s14, 1
      %p116 = scmp.ne.s32.totalorder %s111, %s113
      %p117 = scmp.eq.s32.totalorder %s14, 0
      %p118 = por %p116, %p117
      %p119 = scmp.ne.s32.totalorder %s111, %s113
      %p120 = scmp.eq.s32.totalorder %s19, 1
      %p121 = por %p119, %p120
      %p122 = scmp.ne.s32.totalorder %s113, %s114
      %p123 = scmp.eq.s32.totalorder %s19, 0
      %p124 = por %p122, %p123
      %p125 = scmp.ne.s32.totalorder %s113, %s114
      %p126 = scmp.eq.s32.totalorder %s20, 1
      %p127 = por %p125, %p126
      %p129 = scmp.ne.s32.totalorder %s114, %s128
      %p130 = scmp.eq.s32.totalorder %s20, 0
      %p131 = por %p129, %p130
      %s132 = ssub.s32 %s14, %s21
      %p133 = scmp.eq.s32.totalorder %s132, 0
      %s135 = sadd.s32 %s134, 1
      %s136 = scalar_select %p133, %s134, %s135
      %p139 = pneg %p133
      %p140 = scmp.eq.s32.totalorder %s14, 1
      %p141 = por %p139, %p140
      %p142 = scmp.ne.s32.totalorder %s134, %s137
      %p143 = scmp.eq.s32.totalorder %s14, 0
      %p144 = por %p142, %p143
      %p145 = scmp.ne.s32.totalorder %s134, %s137
      %p146 = scmp.eq.s32.totalorder %s19, 1
      %p147 = por %p145, %p146
      %p148 = scmp.ne.s32.totalorder %s137, %s138
      %p149 = scmp.eq.s32.totalorder %s19, 0
      %p150 = por %p148, %p149
      %p151 = scmp.ne.s32.totalorder %s137, %s138
      %p152 = scmp.eq.s32.totalorder %s20, 1
      %p153 = por %p151, %p152
      %p155 = scmp.ne.s32.totalorder %s138, %s154
      %p156 = scmp.eq.s32.totalorder %s20, 0
      %p157 = por %p155, %p156
      %p158 = scmp.le.s32.totalorder 1, %s14
      %p159 = scmp.lt.s32.totalorder %s14, 3
      %p160 = pnand %p158, %p159
      %p161 = pneg %p160
      // Predicated region
      $region9: #{extractor_head_forward.1} parent=5 // pred_check
        _
      $region10: #{extractor_head_forward.1} parent=5 // pred_check_branch
        %163 = sbr.rel (%p160) target = $region12
      $region11: #{extractor_head_forward.1} parent=5 // pred_region
        %s164 = ssub.s32 %s14, 1
        // Predicated region
        $region13: #{extractor_head_forward.1} parent=11 // pred_check
          %p165 = pneg %p61
        $region14: #{extractor_head_forward.1} parent=11 // pred_check_branch
          %167 = sbr.rel (%p165) target = $region16
        $region15: #{extractor_head_forward.1} parent=11 // pred_region
          _
        $region16: #{extractor_head_forward.1} parent=11 // pred_fallthru
          _
        // Predicated region
        $region17: #{extractor_head_forward.1} parent=11 // pred_check
          %p168 = pneg %p82
        $region18: #{extractor_head_forward.1} parent=11 // pred_check_branch
          %170 = sbr.rel (%p168) target = $region20
        $region19: #{extractor_head_forward.1} parent=11 // pred_region
          _
        $region20: #{extractor_head_forward.1} parent=11 // pred_fallthru
          _
        // Predicated region
        $region21: #{extractor_head_forward.1} parent=11 // pred_check
          %p171 = pneg %p103
        $region22: #{extractor_head_forward.1} parent=11 // pred_check_branch
          %173 = sbr.rel (%p171) target = $region24
        $region23: #{extractor_head_forward.1} parent=11 // pred_region
          _
        $region24: #{extractor_head_forward.1} parent=11 // pred_fallthru
          _
        // Predicated region
        $region25: #{extractor_head_forward.1} parent=11 // pred_check
          %p174 = pneg %p124
        $region26: #{extractor_head_forward.1} parent=11 // pred_check_branch
          %176 = sbr.rel (%p174) target = $region28
        $region27: #{extractor_head_forward.1} parent=11 // pred_region
          _
        $region28: #{extractor_head_forward.1} parent=11 // pred_fallthru
          _
      $region12: #{extractor_head_forward.1} parent=5 // pred_fallthru
        _
      %p177 = scmp.lt.s32.totalorder %s14, 2
      // Predicated region
      $region29: #{extractor_head_forward.1} parent=5 // pred_check
        %p178 = pneg %p177
      $region30: #{extractor_head_forward.1} parent=5 // pred_check_branch
        %180 = sbr.rel (%p178) target = $region32
      $region31: #{extractor_head_forward.1} parent=5 // pred_region
        // Predicated region
        $region33: #{extractor_head_forward.1} parent=31 // pred_check
          %p181 = pneg %p34
        $region34: #{extractor_head_forward.1} parent=31 // pred_check_branch
          %183 = sbr.rel (%p181) target = $region36
        $region35: #{extractor_head_forward.1} parent=31 // pred_region
          %p184 = scmp.lt.s32.totalorder %s14, 1
          %s185 = scalar_select %p184, %s14, 1
          %s186 = smul.addr %s185, 32
          %s187 = smul.addr %s186, 8
          %s188 = scalar_lea.vmem %s0, %s187
        $region36: #{extractor_head_forward.1} parent=31 // pred_fallthru
          _
      $region32: #{extractor_head_forward.1} parent=5 // pred_fallthru
        _
      %p189 = scmp.le.s32.totalorder 1, %s14
      %p190 = scmp.lt.s32.totalorder %s14, 3
      %p191 = pnand %p189, %p190
      %p192 = pneg %p191
      // Predicated region
      $region37: #{extractor_head_forward.1} parent=5 // pred_check
        _
      $region38: #{extractor_head_forward.1} parent=5 // pred_check_branch
        %194 = sbr.rel (%p191) target = $region40
      $region39: #{extractor_head_forward.1} parent=5 // pred_region
        %s195 = ssub.s32 %s14, 1
        %p196 = scmp.lt.s32.totalorder %s19, 1
        %s197 = scalar_select %p196, %s19, 1
        %s198 = smul.addr %s197, 32
        %s199 = smul.addr %s198, 8
        %s200 = scalar_lea.vmem %s0, %s199
        %p201 = pneg %p40
        %p202 = pneg %p37
        %p203 = pneg %p61
        %p204 = pneg %p58
        %p205 = pneg %p82
        %p206 = pneg %p79
        %p207 = pneg %p103
        %p208 = pneg %p100
        %p209 = pneg %p124
        %p210 = pneg %p121
        %p211 = pneg %p150
        %p212 = pneg %p147
        %s213 = sand.u32 %s137, 1
        %s214 = scalar_lea.sflag [#allocation5], %s213
        %s215 = sand.u32 %s137, 1
        %s216 = scalar_lea.vmem [#allocation4], %s215
        %p217 = scmp.lt.s32.totalorder %s19, 1
        %s218 = scalar_select %p217, %s19, 1
        %s219 = smul.addr %s218, 32
        %s220 = smul.addr %s219, 8
        %s221 = scalar_lea.vmem %s0, %s220
        %vm223 = vcmask 31744
        %224 = vst.msk [vmem:[#allocation2] sm:$0xff] %vm223, 0.0
        %225 = vst.msk [vmem:[#allocation2 + $0x8] sm:$0xff] %vm223, 0.0
        %vm226 = vcmask 25600
        %227 = vst.msk [vmem:[#allocation2 + $0x10] sm:$0x3] %vm226, 0.0
        %228 = vst.msk [vmem:[#allocation2 + $0x18] sm:$0xff] %vm223, 0.0
        %229 = vst.msk [vmem:[#allocation2 + $0x20] sm:$0xff] %vm223, 0.0
        %230 = vst.msk [vmem:[#allocation2 + $0x28] sm:$0x3] %vm226, 0.0
        %231 = vst.msk [vmem:[#allocation2 + $0x30] sm:$0xff] %vm223, 0.0
        %232 = vst.msk [vmem:[#allocation2 + $0x38] sm:$0xff] %vm223, 0.0
        %233 = vst.msk [vmem:[#allocation2 + $0x40] sm:$0x3] %vm226, 0.0
        %234 = vst.msk [vmem:[#allocation2 + $0x48] sm:$0xff] %vm223, 0.0
        %235 = vst.msk [vmem:[#allocation2 + $0x50] sm:$0xff] %vm223, 0.0
        %236 = vst.msk [vmem:[#allocation2 + $0x58] sm:$0x3] %vm226, 0.0
        %237 = vst.msk [vmem:[#allocation2 + $0x60] sm:$0xff] %vm223, 0.0
        %238 = vst.msk [vmem:[#allocation2 + $0x68] sm:$0xff] %vm223, 0.0
        %239 = vst.msk [vmem:[#allocation2 + $0x70] sm:$0x3] %vm226, 0.0
        %240 = vst.msk [vmem:[#allocation2 + $0x78] sm:$0xff] %vm223, 0.0
        %241 = vst.msk [vmem:[#allocation2 + $0x80] sm:$0xff] %vm223, 0.0
        %242 = vst.msk [vmem:[#allocation2 + $0x88] sm:$0x3] %vm226, 0.0
        %243 = vst.msk [vmem:[#allocation2 + $0x90] sm:$0xff] %vm223, 0.0
        %244 = vst.msk [vmem:[#allocation2 + $0x98] sm:$0xff] %vm223, 0.0
        %245 = vst.msk [vmem:[#allocation2 + $0xa0] sm:$0x3] %vm226, 0.0
        %246 = vst.msk [vmem:[#allocation2 + $0xa8] sm:$0xff] %vm223, 0.0
        %247 = vst.msk [vmem:[#allocation2 + $0xb0] sm:$0xff] %vm223, 0.0
        %248 = vst.msk [vmem:[#allocation2 + $0xb8] sm:$0x3] %vm226, 0.0
        %249 = vst.msk [vmem:[#allocation2 + $0xc0] sm:$0xff] %vm223, 0.0
        %250 = vst.msk [vmem:[#allocation2 + $0xc8] sm:$0xff] %vm223, 0.0
        %251 = vst.msk [vmem:[#allocation2 + $0xd0] sm:$0x3] %vm226, 0.0
        %252 = vst.msk [vmem:[#allocation2 + $0xd8] sm:$0xff] %vm223, 0.0
        %253 = vst.msk [vmem:[#allocation2 + $0xe0] sm:$0xff] %vm223, 0.0
        %254 = vst.msk [vmem:[#allocation2 + $0xe8] sm:$0x3] %vm226, 0.0
        %255 = vst.msk [vmem:[#allocation2 + $0xf0] sm:$0xff] %vm223, 0.0
        %256 = vst.msk [vmem:[#allocation2 + $0xf8] sm:$0xff] %vm223, 0.0
        %257 = vst.msk [vmem:[#allocation2 + $0x100] sm:$0x3] %vm226, 0.0
        %258 = vst.msk [vmem:[#allocation2 + $0x108] sm:$0xff] %vm223, 0.0
        %259 = vst.msk [vmem:[#allocation2 + $0x110] sm:$0xff] %vm223, 0.0
        %260 = vst.msk [vmem:[#allocation2 + $0x118] sm:$0x3] %vm226, 0.0
        %261 = vst.msk [vmem:[#allocation2 + $0x120] sm:$0xff] %vm223, 0.0
        %262 = vst.msk [vmem:[#allocation2 + $0x128] sm:$0xff] %vm223, 0.0
        %263 = vst.msk [vmem:[#allocation2 + $0x130] sm:$0x3] %vm226, 0.0
        %264 = vst.msk [vmem:[#allocation2 + $0x138] sm:$0xff] %vm223, 0.0
        %265 = vst.msk [vmem:[#allocation2 + $0x140] sm:$0xff] %vm223, 0.0
        %266 = vst.msk [vmem:[#allocation2 + $0x148] sm:$0x3] %vm226, 0.0
        %267 = vst.msk [vmem:[#allocation2 + $0x150] sm:$0xff] %vm223, 0.0
        %268 = vst.msk [vmem:[#allocation2 + $0x158] sm:$0xff] %vm223, 0.0
        %269 = vst.msk [vmem:[#allocation2 + $0x160] sm:$0x3] %vm226, 0.0
        %270 = vst.msk [vmem:[#allocation2 + $0x168] sm:$0xff] %vm223, 0.0
        %271 = vst.msk [vmem:[#allocation2 + $0x170] sm:$0xff] %vm223, 0.0
        %272 = vst.msk [vmem:[#allocation2 + $0x178] sm:$0x3] %vm226, 0.0
        %273 = vst.msk [vmem:[#allocation2 + $0x180] sm:$0xff] %vm223, 0.0
        %274 = vst.msk [vmem:[#allocation2 + $0x188] sm:$0xff] %vm223, 0.0
        %275 = vst.msk [vmem:[#allocation2 + $0x190] sm:$0x3] %vm226, 0.0
        %276 = vst.msk [vmem:[#allocation2 + $0x198] sm:$0xff] %vm223, 0.0
        %277 = vst.msk [vmem:[#allocation2 + $0x1a0] sm:$0xff] %vm223, 0.0
        %278 = vst.msk [vmem:[#allocation2 + $0x1a8] sm:$0x3] %vm226, 0.0
        %v279 = vld [vmem:[%s221] sm:$0xff]
        %v280 = vld [vmem:[%s221 + $0x8] sm:$0xff]
        %v281 = vld [vmem:[%s221 + $0x10] sm:$0xff]
        %v282 = vld [vmem:[%s221 + $0x18] sm:$0xff]
        %v283 = vld [vmem:[%s221 + $0x20] sm:$0xff]
        %v284 = vld [vmem:[%s221 + $0x28] sm:$0xff]
        %v285 = vld [vmem:[%s221 + $0x30] sm:$0xff]
        %v286 = vld [vmem:[%s221 + $0x38] sm:$0xff]
        %v287 = vld [vmem:[%s221 + $0x40] sm:$0xff]
        %v288 = vld [vmem:[%s221 + $0x48] sm:$0xff]
        %v289 = vld [vmem:[%s221 + $0x50] sm:$0xff]
        %v290 = vld [vmem:[%s221 + $0x58] sm:$0xff]
        %v291 = vld [vmem:[%s221 + $0x60] sm:$0xff]
        %v292 = vld [vmem:[%s221 + $0x68] sm:$0xff]
        %v293 = vld [vmem:[%s221 + $0x70] sm:$0xff]
        %v294 = vld [vmem:[%s221 + $0x78] sm:$0xff]
        %v295 = vld [vmem:[%s221 + $0x80] sm:$0xff]
        %v296 = vld [vmem:[%s221 + $0x88] sm:$0xff]
        %v297 = vld [vmem:[%s221 + $0x90] sm:$0xff]
        %v298 = vld [vmem:[%s221 + $0x98] sm:$0xff]
        %v299 = vld [vmem:[%s221 + $0xa0] sm:$0xff]
        %v300 = vld [vmem:[%s221 + $0xa8] sm:$0xff]
        %v301 = vld [vmem:[%s221 + $0xb0] sm:$0xff]
        %v302 = vld [vmem:[%s221 + $0xb8] sm:$0xff]
        %v303 = vld [vmem:[%s221 + $0xc0] sm:$0xff]
        %v304 = vld [vmem:[%s221 + $0xc8] sm:$0xff]
        %v305 = vld [vmem:[%s221 + $0xd0] sm:$0xff]
        %v306 = vld [vmem:[%s221 + $0xd8] sm:$0xff]
        %v307 = vld [vmem:[%s221 + $0xe0] sm:$0xff]
        %v308 = vld [vmem:[%s221 + $0xe8] sm:$0xff]
        %v309 = vld [vmem:[%s221 + $0xf0] sm:$0xff]
        %v310 = vld [vmem:[%s221 + $0xf8] sm:$0xff]
        %s311 = scalar_lea.vmem [#allocation2], 24
        %312 = vst.msk [vmem:[%s311 + $0x1] sm:$0xff] %vm223, %v279
        %313 = vst.msk [vmem:[%s311 + $0x9] sm:$0xff] %vm223, %v280
        %314 = vst.msk [vmem:[%s311 + $0x19] sm:$0xff] %vm223, %v281
        %315 = vst.msk [vmem:[%s311 + $0x21] sm:$0xff] %vm223, %v282
        %316 = vst.msk [vmem:[%s311 + $0x31] sm:$0xff] %vm223, %v283
        %317 = vst.msk [vmem:[%s311 + $0x39] sm:$0xff] %vm223, %v284
        %318 = vst.msk [vmem:[%s311 + $0x49] sm:$0xff] %vm223, %v285
        %319 = vst.msk [vmem:[%s311 + $0x51] sm:$0xff] %vm223, %v286
        %320 = vst.msk [vmem:[%s311 + $0x61] sm:$0xff] %vm223, %v287
        %321 = vst.msk [vmem:[%s311 + $0x69] sm:$0xff] %vm223, %v288
        %322 = vst.msk [vmem:[%s311 + $0x79] sm:$0xff] %vm223, %v289
        %323 = vst.msk [vmem:[%s311 + $0x81] sm:$0xff] %vm223, %v290
        %324 = vst.msk [vmem:[%s311 + $0x91] sm:$0xff] %vm223, %v291
        %325 = vst.msk [vmem:[%s311 + $0x99] sm:$0xff] %vm223, %v292
        %326 = vst.msk [vmem:[%s311 + $0xa9] sm:$0xff] %vm223, %v293
        %327 = vst.msk [vmem:[%s311 + $0xb1] sm:$0xff] %vm223, %v294
        %328 = vst.msk [vmem:[%s311 + $0xc1] sm:$0xff] %vm223, %v295
        %329 = vst.msk [vmem:[%s311 + $0xc9] sm:$0xff] %vm223, %v296
        %330 = vst.msk [vmem:[%s311 + $0xd9] sm:$0xff] %vm223, %v297
        %331 = vst.msk [vmem:[%s311 + $0xe1] sm:$0xff] %vm223, %v298
        %332 = vst.msk [vmem:[%s311 + $0xf1] sm:$0xff] %vm223, %v299
        %333 = vst.msk [vmem:[%s311 + $0xf9] sm:$0xff] %vm223, %v300
        %334 = vst.msk [vmem:[%s311 + $0x109] sm:$0xff] %vm223, %v301
        %335 = vst.msk [vmem:[%s311 + $0x111] sm:$0xff] %vm223, %v302
        %336 = vst.msk [vmem:[%s311 + $0x121] sm:$0xff] %vm223, %v303
        %337 = vst.msk [vmem:[%s311 + $0x129] sm:$0xff] %vm223, %v304
        %338 = vst.msk [vmem:[%s311 + $0x139] sm:$0xff] %vm223, %v305
        %339 = vst.msk [vmem:[%s311 + $0x141] sm:$0xff] %vm223, %v306
        %340 = vst.msk [vmem:[%s311 + $0x151] sm:$0xff] %vm223, %v307
        %341 = vst.msk [vmem:[%s311 + $0x159] sm:$0xff] %vm223, %v308
        %342 = vst.msk [vmem:[%s311 + $0x169] sm:$0xff] %vm223, %v309
        %343 = vst.msk [vmem:[%s311 + $0x171] sm:$0xff] %vm223, %v310
        %v344 = vld [vmem:[#allocation2] sm:$0xff]
        %v345 = vld [vmem:[#allocation2 + $0x8] sm:$0xff]
        %v346 = vld [vmem:[#allocation2 + $0x18] sm:$0xff]
        %v347 = vld [vmem:[#allocation2 + $0x20] sm:$0xff]
        %v348 = vld [vmem:[#allocation2 + $0x30] sm:$0xff]
        %v349 = vld [vmem:[#allocation2 + $0x38] sm:$0xff]
        %v350 = vld [vmem:[#allocation2 + $0x48] sm:$0xff]
        %v351 = vld [vmem:[#allocation2 + $0x50] sm:$0xff]
        %v352 = vld [vmem:[#allocation2 + $0x60] sm:$0xff]
        %v353 = vld [vmem:[#allocation2 + $0x68] sm:$0xff]
        %v354 = vld [vmem:[#allocation2 + $0x78] sm:$0xff]
        %v355 = vld [vmem:[#allocation2 + $0x80] sm:$0xff]
        %v356 = vld [vmem:[#allocation2 + $0x90] sm:$0xff]
        %v357 = vld [vmem:[#allocation2 + $0x98] sm:$0xff]
        %v358 = vld [vmem:[#allocation2 + $0xa8] sm:$0xff]
        %v359 = vld [vmem:[#allocation2 + $0xb0] sm:$0xff]
        %v360 = vld [vmem:[#allocation2 + $0xc0] sm:$0xff]
        %v361 = vld [vmem:[#allocation2 + $0xc8] sm:$0xff]
        %v362 = vld [vmem:[#allocation2 + $0xd8] sm:$0xff]
        %v363 = vld [vmem:[#allocation2 + $0xe0] sm:$0xff]
        %v364 = vld [vmem:[#allocation2 + $0xf0] sm:$0xff]
        %v365 = vld [vmem:[#allocation2 + $0xf8] sm:$0xff]
        %v366 = vld [vmem:[#allocation2 + $0x108] sm:$0xff]
        %v367 = vld [vmem:[#allocation2 + $0x110] sm:$0xff]
        %v368 = vld [vmem:[#allocation2 + $0x120] sm:$0xff]
        %v369 = vld [vmem:[#allocation2 + $0x128] sm:$0xff]
        %v370 = vld [vmem:[#allocation2 + $0x138] sm:$0xff]
        %v371 = vld [vmem:[#allocation2 + $0x140] sm:$0xff]
        %v372 = vld [vmem:[#allocation2 + $0x150] sm:$0xff]
        %v373 = vld [vmem:[#allocation2 + $0x158] sm:$0xff]
        %v374 = vld [vmem:[#allocation2 + $0x168] sm:$0xff]
        %v375 = vld [vmem:[#allocation2 + $0x170] sm:$0xff]
        %376 = vst.msk [vmem:[#allocation3] sm:$0xff] %vm223, %v344
        %377 = vst.msk [vmem:[#allocation3 + $0x8] sm:$0xff] %vm223, %v345
        %378 = vst.msk [vmem:[#allocation3 + $0x10] sm:$0xff] %vm223, %v346
        %379 = vst.msk [vmem:[#allocation3 + $0x18] sm:$0xff] %vm223, %v347
        %380 = vst.msk [vmem:[#allocation3 + $0x20] sm:$0xff] %vm223, %v348
        %381 = vst.msk [vmem:[#allocation3 + $0x28] sm:$0xff] %vm223, %v349
        %382 = vst.msk [vmem:[#allocation3 + $0x30] sm:$0xff] %vm223, %v350
        %383 = vst.msk [vmem:[#allocation3 + $0x38] sm:$0xff] %vm223, %v351
        %384 = vst.msk [vmem:[#allocation3 + $0x40] sm:$0xff] %vm223, %v352
        %385 = vst.msk [vmem:[#allocation3 + $0x48] sm:$0xff] %vm223, %v353
        %386 = vst.msk [vmem:[#allocation3 + $0x50] sm:$0xff] %vm223, %v354
        %387 = vst.msk [vmem:[#allocation3 + $0x58] sm:$0xff] %vm223, %v355
        %388 = vst.msk [vmem:[#allocation3 + $0x60] sm:$0xff] %vm223, %v356
        %389 = vst.msk [vmem:[#allocation3 + $0x68] sm:$0xff] %vm223, %v357
        %390 = vst.msk [vmem:[#allocation3 + $0x70] sm:$0xff] %vm223, %v358
        %391 = vst.msk [vmem:[#allocation3 + $0x78] sm:$0xff] %vm223, %v359
        %392 = vst.msk [vmem:[#allocation3 + $0x80] sm:$0xff] %vm223, %v360
        %393 = vst.msk [vmem:[#allocation3 + $0x88] sm:$0xff] %vm223, %v361
        %394 = vst.msk [vmem:[#allocation3 + $0x90] sm:$0xff] %vm223, %v362
        %395 = vst.msk [vmem:[#allocation3 + $0x98] sm:$0xff] %vm223, %v363
        %396 = vst.msk [vmem:[#allocation3 + $0xa0] sm:$0xff] %vm223, %v364
        %397 = vst.msk [vmem:[#allocation3 + $0xa8] sm:$0xff] %vm223, %v365
        %398 = vst.msk [vmem:[#allocation3 + $0xb0] sm:$0xff] %vm223, %v366
        %399 = vst.msk [vmem:[#allocation3 + $0xb8] sm:$0xff] %vm223, %v367
        %400 = vst.msk [vmem:[#allocation3 + $0xc0] sm:$0xff] %vm223, %v368
        %401 = vst.msk [vmem:[#allocation3 + $0xc8] sm:$0xff] %vm223, %v369
        %402 = vst.msk [vmem:[#allocation3 + $0xd0] sm:$0xff] %vm223, %v370
        %403 = vst.msk [vmem:[#allocation3 + $0xd8] sm:$0xff] %vm223, %v371
        %404 = vst.msk [vmem:[#allocation3 + $0xe0] sm:$0xff] %vm223, %v372
        %405 = vst.msk [vmem:[#allocation3 + $0xe8] sm:$0xff] %vm223, %v373
        %406 = vst.msk [vmem:[#allocation3 + $0xf0] sm:$0xff] %vm223, %v374
        %407 = vst.msk [vmem:[#allocation3 + $0xf8] sm:$0xff] %vm223, %v375
        %v408 = vld [vmem:[#allocation2 + $0x1] sm:$0xff]
        %v409 = vld [vmem:[#allocation2 + $0x9] sm:$0xff]
        %v410 = vld [vmem:[#allocation2 + $0x19] sm:$0xff]
        %v411 = vld [vmem:[#allocation2 + $0x21] sm:$0xff]
        %v412 = vld [vmem:[#allocation2 + $0x31] sm:$0xff]
        %v413 = vld [vmem:[#allocation2 + $0x39] sm:$0xff]
        %v414 = vld [vmem:[#allocation2 + $0x49] sm:$0xff]
        %v415 = vld [vmem:[#allocation2 + $0x51] sm:$0xff]
        %v416 = vld [vmem:[#allocation2 + $0x61] sm:$0xff]
        %v417 = vld [vmem:[#allocation2 + $0x69] sm:$0xff]
        %v418 = vld [vmem:[#allocation2 + $0x79] sm:$0xff]
        %v419 = vld [vmem:[#allocation2 + $0x81] sm:$0xff]
        %v420 = vld [vmem:[#allocation2 + $0x91] sm:$0xff]
        %v421 = vld [vmem:[#allocation2 + $0x99] sm:$0xff]
        %v422 = vld [vmem:[#allocation2 + $0xa9] sm:$0xff]
        %v423 = vld [vmem:[#allocation2 + $0xb1] sm:$0xff]
        %v424 = vld [vmem:[#allocation2 + $0xc1] sm:$0xff]
        %v425 = vld [vmem:[#allocation2 + $0xc9] sm:$0xff]
        %v426 = vld [vmem:[#allocation2 + $0xd9] sm:$0xff]
        %v427 = vld [vmem:[#allocation2 + $0xe1] sm:$0xff]
        %v428 = vld [vmem:[#allocation2 + $0xf1] sm:$0xff]
        %v429 = vld [vmem:[#allocation2 + $0xf9] sm:$0xff]
        %v430 = vld [vmem:[#allocation2 + $0x109] sm:$0xff]
        %v431 = vld [vmem:[#allocation2 + $0x111] sm:$0xff]
        %v432 = vld [vmem:[#allocation2 + $0x121] sm:$0xff]
        %v433 = vld [vmem:[#allocation2 + $0x129] sm:$0xff]
        %v434 = vld [vmem:[#allocation2 + $0x139] sm:$0xff]
        %v435 = vld [vmem:[#allocation2 + $0x141] sm:$0xff]
        %v436 = vld [vmem:[#allocation2 + $0x151] sm:$0xff]
        %v437 = vld [vmem:[#allocation2 + $0x159] sm:$0xff]
        %v438 = vld [vmem:[#allocation2 + $0x169] sm:$0xff]
        %v439 = vld [vmem:[#allocation2 + $0x171] sm:$0xff]
        %472 = vrot.lane.b32.xlu0 %v408, 4
        %v473 = vpop.permute.xlu0 %472
        %474 = vrot.lane.b32.xlu0 %v409, 4
        %v475 = vpop.permute.xlu0 %474
        %476 = vrot.lane.b32.xlu0 %v410, 4
        %v477 = vpop.permute.xlu0 %476
        %478 = vrot.lane.b32.xlu0 %v411, 4
        %v479 = vpop.permute.xlu0 %478
        %480 = vrot.lane.b32.xlu0 %v412, 4
        %v481 = vpop.permute.xlu0 %480
        %482 = vrot.lane.b32.xlu0 %v413, 4
        %v483 = vpop.permute.xlu0 %482
        %484 = vrot.lane.b32.xlu0 %v414, 4
        %v485 = vpop.permute.xlu0 %484
        %486 = vrot.lane.b32.xlu0 %v415, 4
        %v487 = vpop.permute.xlu0 %486
        %488 = vrot.lane.b32.xlu0 %v416, 4
        %v489 = vpop.permute.xlu0 %488
        %490 = vrot.lane.b32.xlu0 %v417, 4
        %v491 = vpop.permute.xlu0 %490
        %492 = vrot.lane.b32.xlu0 %v418, 4
        %v493 = vpop.permute.xlu0 %492
        %494 = vrot.lane.b32.xlu0 %v419, 4
        %v495 = vpop.permute.xlu0 %494
        %496 = vrot.lane.b32.xlu0 %v420, 4
        %v497 = vpop.permute.xlu0 %496
        %498 = vrot.lane.b32.xlu0 %v421, 4
        %v499 = vpop.permute.xlu0 %498
        %500 = vrot.lane.b32.xlu0 %v422, 4
        %v501 = vpop.permute.xlu0 %500
        %502 = vrot.lane.b32.xlu0 %v423, 4
        %v503 = vpop.permute.xlu0 %502
        %504 = vrot.lane.b32.xlu0 %v424, 4
        %v505 = vpop.permute.xlu0 %504
        %506 = vrot.lane.b32.xlu0 %v425, 4
        %v507 = vpop.permute.xlu0 %506
        %508 = vrot.lane.b32.xlu0 %v426, 4
        %v509 = vpop.permute.xlu0 %508
        %510 = vrot.lane.b32.xlu0 %v427, 4
        %v511 = vpop.permute.xlu0 %510
        %512 = vrot.lane.b32.xlu0 %v428, 4
        %v513 = vpop.permute.xlu0 %512
        %514 = vrot.lane.b32.xlu0 %v429, 4
        %v515 = vpop.permute.xlu0 %514
        %516 = vrot.lane.b32.xlu0 %v430, 4
        %v517 = vpop.permute.xlu0 %516
        %518 = vrot.lane.b32.xlu0 %v431, 4
        %v519 = vpop.permute.xlu0 %518
        %520 = vrot.lane.b32.xlu0 %v432, 4
        %v521 = vpop.permute.xlu0 %520
        %522 = vrot.lane.b32.xlu0 %v433, 4
        %v523 = vpop.permute.xlu0 %522
        %524 = vrot.lane.b32.xlu0 %v434, 4
        %v525 = vpop.permute.xlu0 %524
        %526 = vrot.lane.b32.xlu0 %v435, 4
        %v527 = vpop.permute.xlu0 %526
        %528 = vrot.lane.b32.xlu0 %v436, 4
        %v529 = vpop.permute.xlu0 %528
        %530 = vrot.lane.b32.xlu0 %v437, 4
        %v531 = vpop.permute.xlu0 %530
        %532 = vrot.lane.b32.xlu0 %v438, 4
        %v533 = vpop.permute.xlu0 %532
        %534 = vrot.lane.b32.xlu0 %v439, 4
        %v535 = vpop.permute.xlu0 %534
        %vm568 = vcmask 64544
        %569 = vst.msk [vmem:[#allocation3] sm:$0xff] %vm568, %v473
        %570 = vst.msk [vmem:[#allocation3 + $0x8] sm:$0xff] %vm568, %v475
        %571 = vst.msk [vmem:[#allocation3 + $0x10] sm:$0xff] %vm568, %v477
        %572 = vst.msk [vmem:[#allocation3 + $0x18] sm:$0xff] %vm568, %v479
        %573 = vst.msk [vmem:[#allocation3 + $0x20] sm:$0xff] %vm568, %v481
        %574 = vst.msk [vmem:[#allocation3 + $0x28] sm:$0xff] %vm568, %v483
        %575 = vst.msk [vmem:[#allocation3 + $0x30] sm:$0xff] %vm568, %v485
        %576 = vst.msk [vmem:[#allocation3 + $0x38] sm:$0xff] %vm568, %v487
        %577 = vst.msk [vmem:[#allocation3 + $0x40] sm:$0xff] %vm568, %v489
        %578 = vst.msk [vmem:[#allocation3 + $0x48] sm:$0xff] %vm568, %v491
        %579 = vst.msk [vmem:[#allocation3 + $0x50] sm:$0xff] %vm568, %v493
        %580 = vst.msk [vmem:[#allocation3 + $0x58] sm:$0xff] %vm568, %v495
        %581 = vst.msk [vmem:[#allocation3 + $0x60] sm:$0xff] %vm568, %v497
        %582 = vst.msk [vmem:[#allocation3 + $0x68] sm:$0xff] %vm568, %v499
        %583 = vst.msk [vmem:[#allocation3 + $0x70] sm:$0xff] %vm568, %v501
        %584 = vst.msk [vmem:[#allocation3 + $0x78] sm:$0xff] %vm568, %v503
        %585 = vst.msk [vmem:[#allocation3 + $0x80] sm:$0xff] %vm568, %v505
        %586 = vst.msk [vmem:[#allocation3 + $0x88] sm:$0xff] %vm568, %v507
        %587 = vst.msk [vmem:[#allocation3 + $0x90] sm:$0xff] %vm568, %v509
        %588 = vst.msk [vmem:[#allocation3 + $0x98] sm:$0xff] %vm568, %v511
        %589 = vst.msk [vmem:[#allocation3 + $0xa0] sm:$0xff] %vm568, %v513
        %590 = vst.msk [vmem:[#allocation3 + $0xa8] sm:$0xff] %vm568, %v515
        %591 = vst.msk [vmem:[#allocation3 + $0xb0] sm:$0xff] %vm568, %v517
        %592 = vst.msk [vmem:[#allocation3 + $0xb8] sm:$0xff] %vm568, %v519
        %593 = vst.msk [vmem:[#allocation3 + $0xc0] sm:$0xff] %vm568, %v521
        %594 = vst.msk [vmem:[#allocation3 + $0xc8] sm:$0xff] %vm568, %v523
        %595 = vst.msk [vmem:[#allocation3 + $0xd0] sm:$0xff] %vm568, %v525
        %596 = vst.msk [vmem:[#allocation3 + $0xd8] sm:$0xff] %vm568, %v527
        %597 = vst.msk [vmem:[#allocation3 + $0xe0] sm:$0xff] %vm568, %v529
        %598 = vst.msk [vmem:[#allocation3 + $0xe8] sm:$0xff] %vm568, %v531
        %599 = vst.msk [vmem:[#allocation3 + $0xf0] sm:$0xff] %vm568, %v533
        %600 = vst.msk [vmem:[#allocation3 + $0xf8] sm:$0xff] %vm568, %v535
        %v601 = vld [vmem:[#allocation2 + $0x2] sm:$0xff]
        %v602 = vld [vmem:[#allocation2 + $0xa] sm:$0xff]
        %v603 = vld [vmem:[#allocation2 + $0x1a] sm:$0xff]
        %v604 = vld [vmem:[#allocation2 + $0x22] sm:$0xff]
        %v605 = vld [vmem:[#allocation2 + $0x32] sm:$0xff]
        %v606 = vld [vmem:[#allocation2 + $0x3a] sm:$0xff]
        %v607 = vld [vmem:[#allocation2 + $0x4a] sm:$0xff]
        %v608 = vld [vmem:[#allocation2 + $0x52] sm:$0xff]
        %v609 = vld [vmem:[#allocation2 + $0x62] sm:$0xff]
        %v610 = vld [vmem:[#allocation2 + $0x6a] sm:$0xff]
        %v611 = vld [vmem:[#allocation2 + $0x7a] sm:$0xff]
        %v612 = vld [vmem:[#allocation2 + $0x82] sm:$0xff]
        %v613 = vld [vmem:[#allocation2 + $0x92] sm:$0xff]
        %v614 = vld [vmem:[#allocation2 + $0x9a] sm:$0xff]
        %v615 = vld [vmem:[#allocation2 + $0xaa] sm:$0xff]
        %v616 = vld [vmem:[#allocation2 + $0xb2] sm:$0xff]
        %v617 = vld [vmem:[#allocation2 + $0xc2] sm:$0xff]
        %v618 = vld [vmem:[#allocation2 + $0xca] sm:$0xff]
        %v619 = vld [vmem:[#allocation2 + $0xda] sm:$0xff]
        %v620 = vld [vmem:[#allocation2 + $0xe2] sm:$0xff]
        %v621 = vld [vmem:[#allocation2 + $0xf2] sm:$0xff]
        %v622 = vld [vmem:[#allocation2 + $0xfa] sm:$0xff]
        %v623 = vld [vmem:[#allocation2 + $0x10a] sm:$0xff]
        %v624 = vld [vmem:[#allocation2 + $0x112] sm:$0xff]
        %v625 = vld [vmem:[#allocation2 + $0x122] sm:$0xff]
        %v626 = vld [vmem:[#allocation2 + $0x12a] sm:$0xff]
        %v627 = vld [vmem:[#allocation2 + $0x13a] sm:$0xff]
        %v628 = vld [vmem:[#allocation2 + $0x142] sm:$0xff]
        %v629 = vld [vmem:[#allocation2 + $0x152] sm:$0xff]
        %v630 = vld [vmem:[#allocation2 + $0x15a] sm:$0xff]
        %v631 = vld [vmem:[#allocation2 + $0x16a] sm:$0xff]
        %v632 = vld [vmem:[#allocation2 + $0x172] sm:$0xff]
        %665 = vrot.lane.b32.xlu0 %v601, 8
        %v666 = vpop.permute.xlu0 %665
        %667 = vrot.lane.b32.xlu0 %v602, 8
        %v668 = vpop.permute.xlu0 %667
        %669 = vrot.lane.b32.xlu0 %v603, 8
        %v670 = vpop.permute.xlu0 %669
        %671 = vrot.lane.b32.xlu0 %v604, 8
        %v672 = vpop.permute.xlu0 %671
        %673 = vrot.lane.b32.xlu0 %v605, 8
        %v674 = vpop.permute.xlu0 %673
        %675 = vrot.lane.b32.xlu0 %v606, 8
        %v676 = vpop.permute.xlu0 %675
        %677 = vrot.lane.b32.xlu0 %v607, 8
        %v678 = vpop.permute.xlu0 %677
        %679 = vrot.lane.b32.xlu0 %v608, 8
        %v680 = vpop.permute.xlu0 %679
        %681 = vrot.lane.b32.xlu0 %v609, 8
        %v682 = vpop.permute.xlu0 %681
        %683 = vrot.lane.b32.xlu0 %v610, 8
        %v684 = vpop.permute.xlu0 %683
        %685 = vrot.lane.b32.xlu0 %v611, 8
        %v686 = vpop.permute.xlu0 %685
        %687 = vrot.lane.b32.xlu0 %v612, 8
        %v688 = vpop.permute.xlu0 %687
        %689 = vrot.lane.b32.xlu0 %v613, 8
        %v690 = vpop.permute.xlu0 %689
        %691 = vrot.lane.b32.xlu0 %v614, 8
        %v692 = vpop.permute.xlu0 %691
        %693 = vrot.lane.b32.xlu0 %v615, 8
        %v694 = vpop.permute.xlu0 %693
        %695 = vrot.lane.b32.xlu0 %v616, 8
        %v696 = vpop.permute.xlu0 %695
        %697 = vrot.lane.b32.xlu0 %v617, 8
        %v698 = vpop.permute.xlu0 %697
        %699 = vrot.lane.b32.xlu0 %v618, 8
        %v700 = vpop.permute.xlu0 %699
        %701 = vrot.lane.b32.xlu0 %v619, 8
        %v702 = vpop.permute.xlu0 %701
        %703 = vrot.lane.b32.xlu0 %v620, 8
        %v704 = vpop.permute.xlu0 %703
        %705 = vrot.lane.b32.xlu0 %v621, 8
        %v706 = vpop.permute.xlu0 %705
        %707 = vrot.lane.b32.xlu0 %v622, 8
        %v708 = vpop.permute.xlu0 %707
        %709 = vrot.lane.b32.xlu0 %v623, 8
        %v710 = vpop.permute.xlu0 %709
        %711 = vrot.lane.b32.xlu0 %v624, 8
        %v712 = vpop.permute.xlu0 %711
        %713 = vrot.lane.b32.xlu0 %v625, 8
        %v714 = vpop.permute.xlu0 %713
        %715 = vrot.lane.b32.xlu0 %v626, 8
        %v716 = vpop.permute.xlu0 %715
        %717 = vrot.lane.b32.xlu0 %v627, 8
        %v718 = vpop.permute.xlu0 %717
        %719 = vrot.lane.b32.xlu0 %v628, 8
        %v720 = vpop.permute.xlu0 %719
        %721 = vrot.lane.b32.xlu0 %v629, 8
        %v722 = vpop.permute.xlu0 %721
        %723 = vrot.lane.b32.xlu0 %v630, 8
        %v724 = vpop.permute.xlu0 %723
        %725 = vrot.lane.b32.xlu0 %v631, 8
        %v726 = vpop.permute.xlu0 %725
        %727 = vrot.lane.b32.xlu0 %v632, 8
        %v728 = vpop.permute.xlu0 %727
        %vm761 = vcmask 97344
        %762 = vst.msk [vmem:[#allocation3] sm:$0xff] %vm761, %v666
        %763 = vst.msk [vmem:[#allocation3 + $0x8] sm:$0xff] %vm761, %v668
        %764 = vst.msk [vmem:[#allocation3 + $0x10] sm:$0xff] %vm761, %v670
        %765 = vst.msk [vmem:[#allocation3 + $0x18] sm:$0xff] %vm761, %v672
        %766 = vst.msk [vmem:[#allocation3 + $0x20] sm:$0xff] %vm761, %v674
        %767 = vst.msk [vmem:[#allocation3 + $0x28] sm:$0xff] %vm761, %v676
        %768 = vst.msk [vmem:[#allocation3 + $0x30] sm:$0xff] %vm761, %v678
        %769 = vst.msk [vmem:[#allocation3 + $0x38] sm:$0xff] %vm761, %v680
        %770 = vst.msk [vmem:[#allocation3 + $0x40] sm:$0xff] %vm761, %v682
        %771 = vst.msk [vmem:[#allocation3 + $0x48] sm:$0xff] %vm761, %v684
        %772 = vst.msk [vmem:[#allocation3 + $0x50] sm:$0xff] %vm761, %v686
        %773 = vst.msk [vmem:[#allocation3 + $0x58] sm:$0xff] %vm761, %v688
        %774 = vst.msk [vmem:[#allocation3 + $0x60] sm:$0xff] %vm761, %v690
        %775 = vst.msk [vmem:[#allocation3 + $0x68] sm:$0xff] %vm761, %v692
        %776 = vst.msk [vmem:[#allocation3 + $0x70] sm:$0xff] %vm761, %v694
        %777 = vst.msk [vmem:[#allocation3 + $0x78] sm:$0xff] %vm761, %v696
        %778 = vst.msk [vmem:[#allocation3 + $0x80] sm:$0xff] %vm761, %v698
        %779 = vst.msk [vmem:[#allocation3 + $0x88] sm:$0xff] %vm761, %v700
        %780 = vst.msk [vmem:[#allocation3 + $0x90] sm:$0xff] %vm761, %v702
        %781 = vst.msk [vmem:[#allocation3 + $0x98] sm:$0xff] %vm761, %v704
        %782 = vst.msk [vmem:[#allocation3 + $0xa0] sm:$0xff] %vm761, %v706
        %783 = vst.msk [vmem:[#allocation3 + $0xa8] sm:$0xff] %vm761, %v708
        %784 = vst.msk [vmem:[#allocation3 + $0xb0] sm:$0xff] %vm761, %v710
        %785 = vst.msk [vmem:[#allocation3 + $0xb8] sm:$0xff] %vm761, %v712
        %786 = vst.msk [vmem:[#allocation3 + $0xc0] sm:$0xff] %vm761, %v714
        %787 = vst.msk [vmem:[#allocation3 + $0xc8] sm:$0xff] %vm761, %v716
        %788 = vst.msk [vmem:[#allocation3 + $0xd0] sm:$0xff] %vm761, %v718
        %789 = vst.msk [vmem:[#allocation3 + $0xd8] sm:$0xff] %vm761, %v720
        %790 = vst.msk [vmem:[#allocation3 + $0xe0] sm:$0xff] %vm761, %v722
        %791 = vst.msk [vmem:[#allocation3 + $0xe8] sm:$0xff] %vm761, %v724
        %792 = vst.msk [vmem:[#allocation3 + $0xf0] sm:$0xff] %vm761, %v726
        %793 = vst.msk [vmem:[#allocation3 + $0xf8] sm:$0xff] %vm761, %v728
        %v794 = vld [vmem:[%s311] sm:$0xff]
        %v795 = vld [vmem:[%s311 + $0x8] sm:$0xff]
        %v796 = vld [vmem:[%s311 + $0x18] sm:$0xff]
        %v797 = vld [vmem:[%s311 + $0x20] sm:$0xff]
        %v798 = vld [vmem:[%s311 + $0x30] sm:$0xff]
        %v799 = vld [vmem:[%s311 + $0x38] sm:$0xff]
        %v800 = vld [vmem:[%s311 + $0x48] sm:$0xff]
        %v801 = vld [vmem:[%s311 + $0x50] sm:$0xff]
        %v802 = vld [vmem:[%s311 + $0x60] sm:$0xff]
        %v803 = vld [vmem:[%s311 + $0x68] sm:$0xff]
        %v804 = vld [vmem:[%s311 + $0x78] sm:$0xff]
        %v805 = vld [vmem:[%s311 + $0x80] sm:$0xff]
        %v806 = vld [vmem:[%s311 + $0x90] sm:$0xff]
        %v807 = vld [vmem:[%s311 + $0x98] sm:$0xff]
        %v808 = vld [vmem:[%s311 + $0xa8] sm:$0xff]
        %v809 = vld [vmem:[%s311 + $0xb0] sm:$0xff]
        %v810 = vld [vmem:[%s311 + $0xc0] sm:$0xff]
        %v811 = vld [vmem:[%s311 + $0xc8] sm:$0xff]
        %v812 = vld [vmem:[%s311 + $0xd8] sm:$0xff]
        %v813 = vld [vmem:[%s311 + $0xe0] sm:$0xff]
        %v814 = vld [vmem:[%s311 + $0xf0] sm:$0xff]
        %v815 = vld [vmem:[%s311 + $0xf8] sm:$0xff]
        %v816 = vld [vmem:[%s311 + $0x108] sm:$0xff]
        %v817 = vld [vmem:[%s311 + $0x110] sm:$0xff]
        %v818 = vld [vmem:[%s311 + $0x120] sm:$0xff]
        %v819 = vld [vmem:[%s311 + $0x128] sm:$0xff]
        %v820 = vld [vmem:[%s311 + $0x138] sm:$0xff]
        %v821 = vld [vmem:[%s311 + $0x140] sm:$0xff]
        %v822 = vld [vmem:[%s311 + $0x150] sm:$0xff]
        %v823 = vld [vmem:[%s311 + $0x158] sm:$0xff]
        %v824 = vld [vmem:[%s311 + $0x168] sm:$0xff]
        %v825 = vld [vmem:[%s311 + $0x170] sm:$0xff]
        %858 = vrot.lane.b32.xlu0 %v794, 12
        %v859 = vpop.permute.xlu0 %858
        %860 = vrot.lane.b32.xlu0 %v795, 12
        %v861 = vpop.permute.xlu0 %860
        %862 = vrot.lane.b32.xlu0 %v796, 12
        %v863 = vpop.permute.xlu0 %862
        %864 = vrot.lane.b32.xlu0 %v797, 12
        %v865 = vpop.permute.xlu0 %864
        %866 = vrot.lane.b32.xlu0 %v798, 12
        %v867 = vpop.permute.xlu0 %866
        %868 = vrot.lane.b32.xlu0 %v799, 12
        %v869 = vpop.permute.xlu0 %868
        %870 = vrot.lane.b32.xlu0 %v800, 12
        %v871 = vpop.permute.xlu0 %870
        %872 = vrot.lane.b32.xlu0 %v801, 12
        %v873 = vpop.permute.xlu0 %872
        %874 = vrot.lane.b32.xlu0 %v802, 12
        %v875 = vpop.permute.xlu0 %874
        %876 = vrot.lane.b32.xlu0 %v803, 12
        %v877 = vpop.permute.xlu0 %876
        %878 = vrot.lane.b32.xlu0 %v804, 12
        %v879 = vpop.permute.xlu0 %878
        %880 = vrot.lane.b32.xlu0 %v805, 12
        %v881 = vpop.permute.xlu0 %880
        %882 = vrot.lane.b32.xlu0 %v806, 12
        %v883 = vpop.permute.xlu0 %882
        %884 = vrot.lane.b32.xlu0 %v807, 12
        %v885 = vpop.permute.xlu0 %884
        %886 = vrot.lane.b32.xlu0 %v808, 12
        %v887 = vpop.permute.xlu0 %886
        %888 = vrot.lane.b32.xlu0 %v809, 12
        %v889 = vpop.permute.xlu0 %888
        %890 = vrot.lane.b32.xlu0 %v810, 12
        %v891 = vpop.permute.xlu0 %890
        %892 = vrot.lane.b32.xlu0 %v811, 12
        %v893 = vpop.permute.xlu0 %892
        %894 = vrot.lane.b32.xlu0 %v812, 12
        %v895 = vpop.permute.xlu0 %894
        %896 = vrot.lane.b32.xlu0 %v813, 12
        %v897 = vpop.permute.xlu0 %896
        %898 = vrot.lane.b32.xlu0 %v814, 12
        %v899 = vpop.permute.xlu0 %898
        %900 = vrot.lane.b32.xlu0 %v815, 12
        %v901 = vpop.permute.xlu0 %900
        %902 = vrot.lane.b32.xlu0 %v816, 12
        %v903 = vpop.permute.xlu0 %902
        %904 = vrot.lane.b32.xlu0 %v817, 12
        %v905 = vpop.permute.xlu0 %904
        %906 = vrot.lane.b32.xlu0 %v818, 12
        %v907 = vpop.permute.xlu0 %906
        %908 = vrot.lane.b32.xlu0 %v819, 12
        %v909 = vpop.permute.xlu0 %908
        %910 = vrot.lane.b32.xlu0 %v820, 12
        %v911 = vpop.permute.xlu0 %910
        %912 = vrot.lane.b32.xlu0 %v821, 12
        %v913 = vpop.permute.xlu0 %912
        %914 = vrot.lane.b32.xlu0 %v822, 12
        %v915 = vpop.permute.xlu0 %914
        %916 = vrot.lane.b32.xlu0 %v823, 12
        %v917 = vpop.permute.xlu0 %916
        %918 = vrot.lane.b32.xlu0 %v824, 12
        %v919 = vpop.permute.xlu0 %918
        %920 = vrot.lane.b32.xlu0 %v825, 12
        %v921 = vpop.permute.xlu0 %920
        %vm954 = vcmask 130144
        %955 = vst.msk [vmem:[#allocation3] sm:$0xff] %vm954, %v859
        %956 = vst.msk [vmem:[#allocation3 + $0x8] sm:$0xff] %vm954, %v861
        %957 = vst.msk [vmem:[#allocation3 + $0x10] sm:$0xff] %vm954, %v863
        %958 = vst.msk [vmem:[#allocation3 + $0x18] sm:$0xff] %vm954, %v865
        %959 = vst.msk [vmem:[#allocation3 + $0x20] sm:$0xff] %vm954, %v867
        %960 = vst.msk [vmem:[#allocation3 + $0x28] sm:$0xff] %vm954, %v869
        %961 = vst.msk [vmem:[#allocation3 + $0x30] sm:$0xff] %vm954, %v871
        %962 = vst.msk [vmem:[#allocation3 + $0x38] sm:$0xff] %vm954, %v873
        %963 = vst.msk [vmem:[#allocation3 + $0x40] sm:$0xff] %vm954, %v875
        %964 = vst.msk [vmem:[#allocation3 + $0x48] sm:$0xff] %vm954, %v877
        %965 = vst.msk [vmem:[#allocation3 + $0x50] sm:$0xff] %vm954, %v879
        %966 = vst.msk [vmem:[#allocation3 + $0x58] sm:$0xff] %vm954, %v881
        %967 = vst.msk [vmem:[#allocation3 + $0x60] sm:$0xff] %vm954, %v883
        %968 = vst.msk [vmem:[#allocation3 + $0x68] sm:$0xff] %vm954, %v885
        %969 = vst.msk [vmem:[#allocation3 + $0x70] sm:$0xff] %vm954, %v887
        %970 = vst.msk [vmem:[#allocation3 + $0x78] sm:$0xff] %vm954, %v889
        %971 = vst.msk [vmem:[#allocation3 + $0x80] sm:$0xff] %vm954, %v891
        %972 = vst.msk [vmem:[#allocation3 + $0x88] sm:$0xff] %vm954, %v893
        %973 = vst.msk [vmem:[#allocation3 + $0x90] sm:$0xff] %vm954, %v895
        %974 = vst.msk [vmem:[#allocation3 + $0x98] sm:$0xff] %vm954, %v897
        %975 = vst.msk [vmem:[#allocation3 + $0xa0] sm:$0xff] %vm954, %v899
        %976 = vst.msk [vmem:[#allocation3 + $0xa8] sm:$0xff] %vm954, %v901
        %977 = vst.msk [vmem:[#allocation3 + $0xb0] sm:$0xff] %vm954, %v903
        %978 = vst.msk [vmem:[#allocation3 + $0xb8] sm:$0xff] %vm954, %v905
        %979 = vst.msk [vmem:[#allocation3 + $0xc0] sm:$0xff] %vm954, %v907
        %980 = vst.msk [vmem:[#allocation3 + $0xc8] sm:$0xff] %vm954, %v909
        %981 = vst.msk [vmem:[#allocation3 + $0xd0] sm:$0xff] %vm954, %v911
        %982 = vst.msk [vmem:[#allocation3 + $0xd8] sm:$0xff] %vm954, %v913
        %983 = vst.msk [vmem:[#allocation3 + $0xe0] sm:$0xff] %vm954, %v915
        %984 = vst.msk [vmem:[#allocation3 + $0xe8] sm:$0xff] %vm954, %v917
        %985 = vst.msk [vmem:[#allocation3 + $0xf0] sm:$0xff] %vm954, %v919
        %986 = vst.msk [vmem:[#allocation3 + $0xf8] sm:$0xff] %vm954, %v921
        %v987 = vld [vmem:[%s311 + $0x1] sm:$0xff]
        %v988 = vld [vmem:[%s311 + $0x9] sm:$0xff]
        %v989 = vld [vmem:[%s311 + $0x19] sm:$0xff]
        %v990 = vld [vmem:[%s311 + $0x21] sm:$0xff]
        %v991 = vld [vmem:[%s311 + $0x31] sm:$0xff]
        %v992 = vld [vmem:[%s311 + $0x39] sm:$0xff]
        %v993 = vld [vmem:[%s311 + $0x49] sm:$0xff]
        %v994 = vld [vmem:[%s311 + $0x51] sm:$0xff]
        %v995 = vld [vmem:[%s311 + $0x61] sm:$0xff]
        %v996 = vld [vmem:[%s311 + $0x69] sm:$0xff]
        %v997 = vld [vmem:[%s311 + $0x79] sm:$0xff]
        %v998 = vld [vmem:[%s311 + $0x81] sm:$0xff]
        %v999 = vld [vmem:[%s311 + $0x91] sm:$0xff]
        %v1000 = vld [vmem:[%s311 + $0x99] sm:$0xff]
        %v1001 = vld [vmem:[%s311 + $0xa9] sm:$0xff]
        %v1002 = vld [vmem:[%s311 + $0xb1] sm:$0xff]
        %v1003 = vld [vmem:[%s311 + $0xc1] sm:$0xff]
        %v1004 = vld [vmem:[%s311 + $0xc9] sm:$0xff]
        %v1005 = vld [vmem:[%s311 + $0xd9] sm:$0xff]
        %v1006 = vld [vmem:[%s311 + $0xe1] sm:$0xff]
        %v1007 = vld [vmem:[%s311 + $0xf1] sm:$0xff]
        %v1008 = vld [vmem:[%s311 + $0xf9] sm:$0xff]
        %v1009 = vld [vmem:[%s311 + $0x109] sm:$0xff]
        %v1010 = vld [vmem:[%s311 + $0x111] sm:$0xff]
        %v1011 = vld [vmem:[%s311 + $0x121] sm:$0xff]
        %v1012 = vld [vmem:[%s311 + $0x129] sm:$0xff]
        %v1013 = vld [vmem:[%s311 + $0x139] sm:$0xff]
        %v1014 = vld [vmem:[%s311 + $0x141] sm:$0xff]
        %v1015 = vld [vmem:[%s311 + $0x151] sm:$0xff]
        %v1016 = vld [vmem:[%s311 + $0x159] sm:$0xff]
        %v1017 = vld [vmem:[%s311 + $0x169] sm:$0xff]
        %v1018 = vld [vmem:[%s311 + $0x171] sm:$0xff]
        %1051 = vrot.lane.b32.xlu0 %v987, 16
        %v1052 = vpop.permute.xlu0 %1051
        %1053 = vrot.lane.b32.xlu0 %v988, 16
        %v1054 = vpop.permute.xlu0 %1053
        %1055 = vrot.lane.b32.xlu0 %v989, 16
        %v1056 = vpop.permute.xlu0 %1055
        %1057 = vrot.lane.b32.xlu0 %v990, 16
        %v1058 = vpop.permute.xlu0 %1057
        %1059 = vrot.lane.b32.xlu0 %v991, 16
        %v1060 = vpop.permute.xlu0 %1059
        %1061 = vrot.lane.b32.xlu0 %v992, 16
        %v1062 = vpop.permute.xlu0 %1061
        %1063 = vrot.lane.b32.xlu0 %v993, 16
        %v1064 = vpop.permute.xlu0 %1063
        %1065 = vrot.lane.b32.xlu0 %v994, 16
        %v1066 = vpop.permute.xlu0 %1065
        %1067 = vrot.lane.b32.xlu0 %v995, 16
        %v1068 = vpop.permute.xlu0 %1067
        %1069 = vrot.lane.b32.xlu0 %v996, 16
        %v1070 = vpop.permute.xlu0 %1069
        %1071 = vrot.lane.b32.xlu0 %v997, 16
        %v1072 = vpop.permute.xlu0 %1071
        %1073 = vrot.lane.b32.xlu0 %v998, 16
        %v1074 = vpop.permute.xlu0 %1073
        %1075 = vrot.lane.b32.xlu0 %v999, 16
        %v1076 = vpop.permute.xlu0 %1075
        %1077 = vrot.lane.b32.xlu0 %v1000, 16
        %v1078 = vpop.permute.xlu0 %1077
        %1079 = vrot.lane.b32.xlu0 %v1001, 16
        %v1080 = vpop.permute.xlu0 %1079
        %1081 = vrot.lane.b32.xlu0 %v1002, 16
        %v1082 = vpop.permute.xlu0 %1081
        %1083 = vrot.lane.b32.xlu0 %v1003, 16
        %v1084 = vpop.permute.xlu0 %1083
        %1085 = vrot.lane.b32.xlu0 %v1004, 16
        %v1086 = vpop.permute.xlu0 %1085
        %1087 = vrot.lane.b32.xlu0 %v1005, 16
        %v1088 = vpop.permute.xlu0 %1087
        %1089 = vrot.lane.b32.xlu0 %v1006, 16
        %v1090 = vpop.permute.xlu0 %1089
        %1091 = vrot.lane.b32.xlu0 %v1007, 16
        %v1092 = vpop.permute.xlu0 %1091
        %1093 = vrot.lane.b32.xlu0 %v1008, 16
        %v1094 = vpop.permute.xlu0 %1093
        %1095 = vrot.lane.b32.xlu0 %v1009, 16
        %v1096 = vpop.permute.xlu0 %1095
        %1097 = vrot.lane.b32.xlu0 %v1010, 16
        %v1098 = vpop.permute.xlu0 %1097
        %1099 = vrot.lane.b32.xlu0 %v1011, 16
        %v1100 = vpop.permute.xlu0 %1099
        %1101 = vrot.lane.b32.xlu0 %v1012, 16
        %v1102 = vpop.permute.xlu0 %1101
        %1103 = vrot.lane.b32.xlu0 %v1013, 16
        %v1104 = vpop.permute.xlu0 %1103
        %1105 = vrot.lane.b32.xlu0 %v1014, 16
        %v1106 = vpop.permute.xlu0 %1105
        %1107 = vrot.lane.b32.xlu0 %v1015, 16
        %v1108 = vpop.permute.xlu0 %1107
        %1109 = vrot.lane.b32.xlu0 %v1016, 16
        %v1110 = vpop.permute.xlu0 %1109
        %1111 = vrot.lane.b32.xlu0 %v1017, 16
        %v1112 = vpop.permute.xlu0 %1111
        %1113 = vrot.lane.b32.xlu0 %v1018, 16
        %v1114 = vpop.permute.xlu0 %1113
        %vm1147 = vcmask 162944
        %1148 = vst.msk [vmem:[#allocation3] sm:$0xff] %vm1147, %v1052
        %1149 = vst.msk [vmem:[#allocation3 + $0x8] sm:$0xff] %vm1147, %v1054
        %1150 = vst.msk [vmem:[#allocation3 + $0x10] sm:$0xff] %vm1147, %v1056
        %1151 = vst.msk [vmem:[#allocation3 + $0x18] sm:$0xff] %vm1147, %v1058
        %1152 = vst.msk [vmem:[#allocation3 + $0x20] sm:$0xff] %vm1147, %v1060
        %1153 = vst.msk [vmem:[#allocation3 + $0x28] sm:$0xff] %vm1147, %v1062
        %1154 = vst.msk [vmem:[#allocation3 + $0x30] sm:$0xff] %vm1147, %v1064
        %1155 = vst.msk [vmem:[#allocation3 + $0x38] sm:$0xff] %vm1147, %v1066
        %1156 = vst.msk [vmem:[#allocation3 + $0x40] sm:$0xff] %vm1147, %v1068
        %1157 = vst.msk [vmem:[#allocation3 + $0x48] sm:$0xff] %vm1147, %v1070
        %1158 = vst.msk [vmem:[#allocation3 + $0x50] sm:$0xff] %vm1147, %v1072
        %1159 = vst.msk [vmem:[#allocation3 + $0x58] sm:$0xff] %vm1147, %v1074
        %1160 = vst.msk [vmem:[#allocation3 + $0x60] sm:$0xff] %vm1147, %v1076
        %1161 = vst.msk [vmem:[#allocation3 + $0x68] sm:$0xff] %vm1147, %v1078
        %1162 = vst.msk [vmem:[#allocation3 + $0x70] sm:$0xff] %vm1147, %v1080
        %1163 = vst.msk [vmem:[#allocation3 + $0x78] sm:$0xff] %vm1147, %v1082
        %1164 = vst.msk [vmem:[#allocation3 + $0x80] sm:$0xff] %vm1147, %v1084
        %1165 = vst.msk [vmem:[#allocation3 + $0x88] sm:$0xff] %vm1147, %v1086
        %1166 = vst.msk [vmem:[#allocation3 + $0x90] sm:$0xff] %vm1147, %v1088
        %1167 = vst.msk [vmem:[#allocation3 + $0x98] sm:$0xff] %vm1147, %v1090
        %1168 = vst.msk [vmem:[#allocation3 + $0xa0] sm:$0xff] %vm1147, %v1092
        %1169 = vst.msk [vmem:[#allocation3 + $0xa8] sm:$0xff] %vm1147, %v1094
        %1170 = vst.msk [vmem:[#allocation3 + $0xb0] sm:$0xff] %vm1147, %v1096
        %1171 = vst.msk [vmem:[#allocation3 + $0xb8] sm:$0xff] %vm1147, %v1098
        %1172 = vst.msk [vmem:[#allocation3 + $0xc0] sm:$0xff] %vm1147, %v1100
        %1173 = vst.msk [vmem:[#allocation3 + $0xc8] sm:$0xff] %vm1147, %v1102
        %1174 = vst.msk [vmem:[#allocation3 + $0xd0] sm:$0xff] %vm1147, %v1104
        %1175 = vst.msk [vmem:[#allocation3 + $0xd8] sm:$0xff] %vm1147, %v1106
        %1176 = vst.msk [vmem:[#allocation3 + $0xe0] sm:$0xff] %vm1147, %v1108
        %1177 = vst.msk [vmem:[#allocation3 + $0xe8] sm:$0xff] %vm1147, %v1110
        %1178 = vst.msk [vmem:[#allocation3 + $0xf0] sm:$0xff] %vm1147, %v1112
        %1179 = vst.msk [vmem:[#allocation3 + $0xf8] sm:$0xff] %vm1147, %v1114
        %v1180 = vld [vmem:[%s311 + $0x2] sm:$0xff]
        %v1181 = vld [vmem:[%s311 + $0xa] sm:$0xff]
        %v1182 = vld [vmem:[%s311 + $0x1a] sm:$0xff]
        %v1183 = vld [vmem:[%s311 + $0x22] sm:$0xff]
        %v1184 = vld [vmem:[%s311 + $0x32] sm:$0xff]
        %v1185 = vld [vmem:[%s311 + $0x3a] sm:$0xff]
        %v1186 = vld [vmem:[%s311 + $0x4a] sm:$0xff]
        %v1187 = vld [vmem:[%s311 + $0x52] sm:$0xff]
        %v1188 = vld [vmem:[%s311 + $0x62] sm:$0xff]
        %v1189 = vld [vmem:[%s311 + $0x6a] sm:$0xff]
        %v1190 = vld [vmem:[%s311 + $0x7a] sm:$0xff]
        %v1191 = vld [vmem:[%s311 + $0x82] sm:$0xff]
        %v1192 = vld [vmem:[%s311 + $0x92] sm:$0xff]
        %v1193 = vld [vmem:[%s311 + $0x9a] sm:$0xff]
        %v1194 = vld [vmem:[%s311 + $0xaa] sm:$0xff]
        %v1195 = vld [vmem:[%s311 + $0xb2] sm:$0xff]
        %v1196 = vld [vmem:[%s311 + $0xc2] sm:$0xff]
        %v1197 = vld [vmem:[%s311 + $0xca] sm:$0xff]
        %v1198 = vld [vmem:[%s311 + $0xda] sm:$0xff]
        %v1199 = vld [vmem:[%s311 + $0xe2] sm:$0xff]
        %v1200 = vld [vmem:[%s311 + $0xf2] sm:$0xff]
        %v1201 = vld [vmem:[%s311 + $0xfa] sm:$0xff]
        %v1202 = vld [vmem:[%s311 + $0x10a] sm:$0xff]
        %v1203 = vld [vmem:[%s311 + $0x112] sm:$0xff]
        %v1204 = vld [vmem:[%s311 + $0x122] sm:$0xff]
        %v1205 = vld [vmem:[%s311 + $0x12a] sm:$0xff]
        %v1206 = vld [vmem:[%s311 + $0x13a] sm:$0xff]
        %v1207 = vld [vmem:[%s311 + $0x142] sm:$0xff]
        %v1208 = vld [vmem:[%s311 + $0x152] sm:$0xff]
        %v1209 = vld [vmem:[%s311 + $0x15a] sm:$0xff]
        %v1210 = vld [vmem:[%s311 + $0x16a] sm:$0xff]
        %v1211 = vld [vmem:[%s311 + $0x172] sm:$0xff]
        %1244 = vrot.lane.b32.xlu0 %v1180, 20
        %v1245 = vpop.permute.xlu0 %1244
        %1246 = vrot.lane.b32.xlu0 %v1181, 20
        %v1247 = vpop.permute.xlu0 %1246
        %1248 = vrot.lane.b32.xlu0 %v1182, 20
        %v1249 = vpop.permute.xlu0 %1248
        %1250 = vrot.lane.b32.xlu0 %v1183, 20
        %v1251 = vpop.permute.xlu0 %1250
        %1252 = vrot.lane.b32.xlu0 %v1184, 20
        %v1253 = vpop.permute.xlu0 %1252
        %1254 = vrot.lane.b32.xlu0 %v1185, 20
        %v1255 = vpop.permute.xlu0 %1254
        %1256 = vrot.lane.b32.xlu0 %v1186, 20
        %v1257 = vpop.permute.xlu0 %1256
        %1258 = vrot.lane.b32.xlu0 %v1187, 20
        %v1259 = vpop.permute.xlu0 %1258
        %1260 = vrot.lane.b32.xlu0 %v1188, 20
        %v1261 = vpop.permute.xlu0 %1260
        %1262 = vrot.lane.b32.xlu0 %v1189, 20
        %v1263 = vpop.permute.xlu0 %1262
        %1264 = vrot.lane.b32.xlu0 %v1190, 20
        %v1265 = vpop.permute.xlu0 %1264
        %1266 = vrot.lane.b32.xlu0 %v1191, 20
        %v1267 = vpop.permute.xlu0 %1266
        %1268 = vrot.lane.b32.xlu0 %v1192, 20
        %v1269 = vpop.permute.xlu0 %1268
        %1270 = vrot.lane.b32.xlu0 %v1193, 20
        %v1271 = vpop.permute.xlu0 %1270
        %1272 = vrot.lane.b32.xlu0 %v1194, 20
        %v1273 = vpop.permute.xlu0 %1272
        %1274 = vrot.lane.b32.xlu0 %v1195, 20
        %v1275 = vpop.permute.xlu0 %1274
        %1276 = vrot.lane.b32.xlu0 %v1196, 20
        %v1277 = vpop.permute.xlu0 %1276
        %1278 = vrot.lane.b32.xlu0 %v1197, 20
        %v1279 = vpop.permute.xlu0 %1278
        %1280 = vrot.lane.b32.xlu0 %v1198, 20
        %v1281 = vpop.permute.xlu0 %1280
        %1282 = vrot.lane.b32.xlu0 %v1199, 20
        %v1283 = vpop.permute.xlu0 %1282
        %1284 = vrot.lane.b32.xlu0 %v1200, 20
        %v1285 = vpop.permute.xlu0 %1284
        %1286 = vrot.lane.b32.xlu0 %v1201, 20
        %v1287 = vpop.permute.xlu0 %1286
        %1288 = vrot.lane.b32.xlu0 %v1202, 20
        %v1289 = vpop.permute.xlu0 %1288
        %1290 = vrot.lane.b32.xlu0 %v1203, 20
        %v1291 = vpop.permute.xlu0 %1290
        %1292 = vrot.lane.b32.xlu0 %v1204, 20
        %v1293 = vpop.permute.xlu0 %1292
        %1294 = vrot.lane.b32.xlu0 %v1205, 20
        %v1295 = vpop.permute.xlu0 %1294
        %1296 = vrot.lane.b32.xlu0 %v1206, 20
        %v1297 = vpop.permute.xlu0 %1296
        %1298 = vrot.lane.b32.xlu0 %v1207, 20
        %v1299 = vpop.permute.xlu0 %1298
        %1300 = vrot.lane.b32.xlu0 %v1208, 20
        %v1301 = vpop.permute.xlu0 %1300
        %1302 = vrot.lane.b32.xlu0 %v1209, 20
        %v1303 = vpop.permute.xlu0 %1302
        %1304 = vrot.lane.b32.xlu0 %v1210, 20
        %v1305 = vpop.permute.xlu0 %1304
        %1306 = vrot.lane.b32.xlu0 %v1211, 20
        %v1307 = vpop.permute.xlu0 %1306
        %vm1340 = vcmask 195744
        %1341 = vst.msk [vmem:[#allocation3] sm:$0xff] %vm1340, %v1245
        %1342 = vst.msk [vmem:[#allocation3 + $0x8] sm:$0xff] %vm1340, %v1247
        %1343 = vst.msk [vmem:[#allocation3 + $0x10] sm:$0xff] %vm1340, %v1249
        %1344 = vst.msk [vmem:[#allocation3 + $0x18] sm:$0xff] %vm1340, %v1251
        %1345 = vst.msk [vmem:[#allocation3 + $0x20] sm:$0xff] %vm1340, %v1253
        %1346 = vst.msk [vmem:[#allocation3 + $0x28] sm:$0xff] %vm1340, %v1255
        %1347 = vst.msk [vmem:[#allocation3 + $0x30] sm:$0xff] %vm1340, %v1257
        %1348 = vst.msk [vmem:[#allocation3 + $0x38] sm:$0xff] %vm1340, %v1259
        %1349 = vst.msk [vmem:[#allocation3 + $0x40] sm:$0xff] %vm1340, %v1261
        %1350 = vst.msk [vmem:[#allocation3 + $0x48] sm:$0xff] %vm1340, %v1263
        %1351 = vst.msk [vmem:[#allocation3 + $0x50] sm:$0xff] %vm1340, %v1265
        %1352 = vst.msk [vmem:[#allocation3 + $0x58] sm:$0xff] %vm1340, %v1267
        %1353 = vst.msk [vmem:[#allocation3 + $0x60] sm:$0xff] %vm1340, %v1269
        %1354 = vst.msk [vmem:[#allocation3 + $0x68] sm:$0xff] %vm1340, %v1271
        %1355 = vst.msk [vmem:[#allocation3 + $0x70] sm:$0xff] %vm1340, %v1273
        %1356 = vst.msk [vmem:[#allocation3 + $0x78] sm:$0xff] %vm1340, %v1275
        %1357 = vst.msk [vmem:[#allocation3 + $0x80] sm:$0xff] %vm1340, %v1277
        %1358 = vst.msk [vmem:[#allocation3 + $0x88] sm:$0xff] %vm1340, %v1279
        %1359 = vst.msk [vmem:[#allocation3 + $0x90] sm:$0xff] %vm1340, %v1281
        %1360 = vst.msk [vmem:[#allocation3 + $0x98] sm:$0xff] %vm1340, %v1283
        %1361 = vst.msk [vmem:[#allocation3 + $0xa0] sm:$0xff] %vm1340, %v1285
        %1362 = vst.msk [vmem:[#allocation3 + $0xa8] sm:$0xff] %vm1340, %v1287
        %1363 = vst.msk [vmem:[#allocation3 + $0xb0] sm:$0xff] %vm1340, %v1289
        %1364 = vst.msk [vmem:[#allocation3 + $0xb8] sm:$0xff] %vm1340, %v1291
        %1365 = vst.msk [vmem:[#allocation3 + $0xc0] sm:$0xff] %vm1340, %v1293
        %1366 = vst.msk [vmem:[#allocation3 + $0xc8] sm:$0xff] %vm1340, %v1295
        %1367 = vst.msk [vmem:[#allocation3 + $0xd0] sm:$0xff] %vm1340, %v1297
        %1368 = vst.msk [vmem:[#allocation3 + $0xd8] sm:$0xff] %vm1340, %v1299
        %1369 = vst.msk [vmem:[#allocation3 + $0xe0] sm:$0xff] %vm1340, %v1301
        %1370 = vst.msk [vmem:[#allocation3 + $0xe8] sm:$0xff] %vm1340, %v1303
        %1371 = vst.msk [vmem:[#allocation3 + $0xf0] sm:$0xff] %vm1340, %v1305
        %1372 = vst.msk [vmem:[#allocation3 + $0xf8] sm:$0xff] %vm1340, %v1307
        %s1373 = scalar_lea.vmem [#allocation2], 48
        %v1374 = vld [vmem:[%s1373] sm:$0xff]
        %v1375 = vld [vmem:[%s1373 + $0x8] sm:$0xff]
        %v1376 = vld [vmem:[%s1373 + $0x18] sm:$0xff]
        %v1377 = vld [vmem:[%s1373 + $0x20] sm:$0xff]
        %v1378 = vld [vmem:[%s1373 + $0x30] sm:$0xff]
        %v1379 = vld [vmem:[%s1373 + $0x38] sm:$0xff]
        %v1380 = vld [vmem:[%s1373 + $0x48] sm:$0xff]
        %v1381 = vld [vmem:[%s1373 + $0x50] sm:$0xff]
        %v1382 = vld [vmem:[%s1373 + $0x60] sm:$0xff]
        %v1383 = vld [vmem:[%s1373 + $0x68] sm:$0xff]
        %v1384 = vld [vmem:[%s1373 + $0x78] sm:$0xff]
        %v1385 = vld [vmem:[%s1373 + $0x80] sm:$0xff]
        %v1386 = vld [vmem:[%s1373 + $0x90] sm:$0xff]
        %v1387 = vld [vmem:[%s1373 + $0x98] sm:$0xff]
        %v1388 = vld [vmem:[%s1373 + $0xa8] sm:$0xff]
        %v1389 = vld [vmem:[%s1373 + $0xb0] sm:$0xff]
        %v1390 = vld [vmem:[%s1373 + $0xc0] sm:$0xff]
        %v1391 = vld [vmem:[%s1373 + $0xc8] sm:$0xff]
        %v1392 = vld [vmem:[%s1373 + $0xd8] sm:$0xff]
        %v1393 = vld [vmem:[%s1373 + $0xe0] sm:$0xff]
        %v1394 = vld [vmem:[%s1373 + $0xf0] sm:$0xff]
        %v1395 = vld [vmem:[%s1373 + $0xf8] sm:$0xff]
        %v1396 = vld [vmem:[%s1373 + $0x108] sm:$0xff]
        %v1397 = vld [vmem:[%s1373 + $0x110] sm:$0xff]
        %v1398 = vld [vmem:[%s1373 + $0x120] sm:$0xff]
        %v1399 = vld [vmem:[%s1373 + $0x128] sm:$0xff]
        %v1400 = vld [vmem:[%s1373 + $0x138] sm:$0xff]
        %v1401 = vld [vmem:[%s1373 + $0x140] sm:$0xff]
        %v1402 = vld [vmem:[%s1373 + $0x150] sm:$0xff]
        %v1403 = vld [vmem:[%s1373 + $0x158] sm:$0xff]
        %v1404 = vld [vmem:[%s1373 + $0x168] sm:$0xff]
        %v1405 = vld [vmem:[%s1373 + $0x170] sm:$0xff]
        %1438 = vrot.lane.b32.xlu0 %v1374, 24
        %v1439 = vpop.permute.xlu0 %1438
        %1440 = vrot.lane.b32.xlu0 %v1375, 24
        %v1441 = vpop.permute.xlu0 %1440
        %1442 = vrot.lane.b32.xlu0 %v1376, 24
        %v1443 = vpop.permute.xlu0 %1442
        %1444 = vrot.lane.b32.xlu0 %v1377, 24
        %v1445 = vpop.permute.xlu0 %1444
        %1446 = vrot.lane.b32.xlu0 %v1378, 24
        %v1447 = vpop.permute.xlu0 %1446
        %1448 = vrot.lane.b32.xlu0 %v1379, 24
        %v1449 = vpop.permute.xlu0 %1448
        %1450 = vrot.lane.b32.xlu0 %v1380, 24
        %v1451 = vpop.permute.xlu0 %1450
        %1452 = vrot.lane.b32.xlu0 %v1381, 24
        %v1453 = vpop.permute.xlu0 %1452
        %1454 = vrot.lane.b32.xlu0 %v1382, 24
        %v1455 = vpop.permute.xlu0 %1454
        %1456 = vrot.lane.b32.xlu0 %v1383, 24
        %v1457 = vpop.permute.xlu0 %1456
        %1458 = vrot.lane.b32.xlu0 %v1384, 24
        %v1459 = vpop.permute.xlu0 %1458
        %1460 = vrot.lane.b32.xlu0 %v1385, 24
        %v1461 = vpop.permute.xlu0 %1460
        %1462 = vrot.lane.b32.xlu0 %v1386, 24
        %v1463 = vpop.permute.xlu0 %1462
        %1464 = vrot.lane.b32.xlu0 %v1387, 24
        %v1465 = vpop.permute.xlu0 %1464
        %1466 = vrot.lane.b32.xlu0 %v1388, 24
        %v1467 = vpop.permute.xlu0 %1466
        %1468 = vrot.lane.b32.xlu0 %v1389, 24
        %v1469 = vpop.permute.xlu0 %1468
        %1470 = vrot.lane.b32.xlu0 %v1390, 24
        %v1471 = vpop.permute.xlu0 %1470
        %1472 = vrot.lane.b32.xlu0 %v1391, 24
        %v1473 = vpop.permute.xlu0 %1472
        %1474 = vrot.lane.b32.xlu0 %v1392, 24
        %v1475 = vpop.permute.xlu0 %1474
        %1476 = vrot.lane.b32.xlu0 %v1393, 24
        %v1477 = vpop.permute.xlu0 %1476
        %1478 = vrot.lane.b32.xlu0 %v1394, 24
        %v1479 = vpop.permute.xlu0 %1478
        %1480 = vrot.lane.b32.xlu0 %v1395, 24
        %v1481 = vpop.permute.xlu0 %1480
        %1482 = vrot.lane.b32.xlu0 %v1396, 24
        %v1483 = vpop.permute.xlu0 %1482
        %1484 = vrot.lane.b32.xlu0 %v1397, 24
        %v1485 = vpop.permute.xlu0 %1484
        %1486 = vrot.lane.b32.xlu0 %v1398, 24
        %v1487 = vpop.permute.xlu0 %1486
        %1488 = vrot.lane.b32.xlu0 %v1399, 24
        %v1489 = vpop.permute.xlu0 %1488
        %1490 = vrot.lane.b32.xlu0 %v1400, 24
        %v1491 = vpop.permute.xlu0 %1490
        %1492 = vrot.lane.b32.xlu0 %v1401, 24
        %v1493 = vpop.permute.xlu0 %1492
        %1494 = vrot.lane.b32.xlu0 %v1402, 24
        %v1495 = vpop.permute.xlu0 %1494
        %1496 = vrot.lane.b32.xlu0 %v1403, 24
        %v1497 = vpop.permute.xlu0 %1496
        %1498 = vrot.lane.b32.xlu0 %v1404, 24
        %v1499 = vpop.permute.xlu0 %1498
        %1500 = vrot.lane.b32.xlu0 %v1405, 24
        %v1501 = vpop.permute.xlu0 %1500
        %vm1534 = vcmask 228544
        %1535 = vst.msk [vmem:[#allocation3] sm:$0xff] %vm1534, %v1439
        %1536 = vst.msk [vmem:[#allocation3 + $0x8] sm:$0xff] %vm1534, %v1441
        %1537 = vst.msk [vmem:[#allocation3 + $0x10] sm:$0xff] %vm1534, %v1443
        %1538 = vst.msk [vmem:[#allocation3 + $0x18] sm:$0xff] %vm1534, %v1445
        %1539 = vst.msk [vmem:[#allocation3 + $0x20] sm:$0xff] %vm1534, %v1447
        %1540 = vst.msk [vmem:[#allocation3 + $0x28] sm:$0xff] %vm1534, %v1449
        %1541 = vst.msk [vmem:[#allocation3 + $0x30] sm:$0xff] %vm1534, %v1451
        %1542 = vst.msk [vmem:[#allocation3 + $0x38] sm:$0xff] %vm1534, %v1453
        %1543 = vst.msk [vmem:[#allocation3 + $0x40] sm:$0xff] %vm1534, %v1455
        %1544 = vst.msk [vmem:[#allocation3 + $0x48] sm:$0xff] %vm1534, %v1457
        %1545 = vst.msk [vmem:[#allocation3 + $0x50] sm:$0xff] %vm1534, %v1459
        %1546 = vst.msk [vmem:[#allocation3 + $0x58] sm:$0xff] %vm1534, %v1461
        %1547 = vst.msk [vmem:[#allocation3 + $0x60] sm:$0xff] %vm1534, %v1463
        %1548 = vst.msk [vmem:[#allocation3 + $0x68] sm:$0xff] %vm1534, %v1465
        %1549 = vst.msk [vmem:[#allocation3 + $0x70] sm:$0xff] %vm1534, %v1467
        %1550 = vst.msk [vmem:[#allocation3 + $0x78] sm:$0xff] %vm1534, %v1469
        %1551 = vst.msk [vmem:[#allocation3 + $0x80] sm:$0xff] %vm1534, %v1471
        %1552 = vst.msk [vmem:[#allocation3 + $0x88] sm:$0xff] %vm1534, %v1473
        %1553 = vst.msk [vmem:[#allocation3 + $0x90] sm:$0xff] %vm1534, %v1475
        %1554 = vst.msk [vmem:[#allocation3 + $0x98] sm:$0xff] %vm1534, %v1477
        %1555 = vst.msk [vmem:[#allocation3 + $0xa0] sm:$0xff] %vm1534, %v1479
        %1556 = vst.msk [vmem:[#allocation3 + $0xa8] sm:$0xff] %vm1534, %v1481
        %1557 = vst.msk [vmem:[#allocation3 + $0xb0] sm:$0xff] %vm1534, %v1483
        %1558 = vst.msk [vmem:[#allocation3 + $0xb8] sm:$0xff] %vm1534, %v1485
        %1559 = vst.msk [vmem:[#allocation3 + $0xc0] sm:$0xff] %vm1534, %v1487
        %1560 = vst.msk [vmem:[#allocation3 + $0xc8] sm:$0xff] %vm1534, %v1489
        %1561 = vst.msk [vmem:[#allocation3 + $0xd0] sm:$0xff] %vm1534, %v1491
        %1562 = vst.msk [vmem:[#allocation3 + $0xd8] sm:$0xff] %vm1534, %v1493
        %1563 = vst.msk [vmem:[#allocation3 + $0xe0] sm:$0xff] %vm1534, %v1495
        %1564 = vst.msk [vmem:[#allocation3 + $0xe8] sm:$0xff] %vm1534, %v1497
        %1565 = vst.msk [vmem:[#allocation3 + $0xf0] sm:$0xff] %vm1534, %v1499
        %1566 = vst.msk [vmem:[#allocation3 + $0xf8] sm:$0xff] %vm1534, %v1501
        %v1567 = vld [vmem:[%s1373 + $0x1] sm:$0xff]
        %v1568 = vld [vmem:[%s1373 + $0x9] sm:$0xff]
        %v1569 = vld [vmem:[%s1373 + $0x19] sm:$0xff]
        %v1570 = vld [vmem:[%s1373 + $0x21] sm:$0xff]
        %v1571 = vld [vmem:[%s1373 + $0x31] sm:$0xff]
        %v1572 = vld [vmem:[%s1373 + $0x39] sm:$0xff]
        %v1573 = vld [vmem:[%s1373 + $0x49] sm:$0xff]
        %v1574 = vld [vmem:[%s1373 + $0x51] sm:$0xff]
        %v1575 = vld [vmem:[%s1373 + $0x61] sm:$0xff]
        %v1576 = vld [vmem:[%s1373 + $0x69] sm:$0xff]
        %v1577 = vld [vmem:[%s1373 + $0x79] sm:$0xff]
        %v1578 = vld [vmem:[%s1373 + $0x81] sm:$0xff]
        %v1579 = vld [vmem:[%s1373 + $0x91] sm:$0xff]
        %v1580 = vld [vmem:[%s1373 + $0x99] sm:$0xff]
        %v1581 = vld [vmem:[%s1373 + $0xa9] sm:$0xff]
        %v1582 = vld [vmem:[%s1373 + $0xb1] sm:$0xff]
        %v1583 = vld [vmem:[%s1373 + $0xc1] sm:$0xff]
        %v1584 = vld [vmem:[%s1373 + $0xc9] sm:$0xff]
        %v1585 = vld [vmem:[%s1373 + $0xd9] sm:$0xff]
        %v1586 = vld [vmem:[%s1373 + $0xe1] sm:$0xff]
        %v1587 = vld [vmem:[%s1373 + $0xf1] sm:$0xff]
        %v1588 = vld [vmem:[%s1373 + $0xf9] sm:$0xff]
        %v1589 = vld [vmem:[%s1373 + $0x109] sm:$0xff]
        %v1590 = vld [vmem:[%s1373 + $0x111] sm:$0xff]
        %v1591 = vld [vmem:[%s1373 + $0x121] sm:$0xff]
        %v1592 = vld [vmem:[%s1373 + $0x129] sm:$0xff]
        %v1593 = vld [vmem:[%s1373 + $0x139] sm:$0xff]
        %v1594 = vld [vmem:[%s1373 + $0x141] sm:$0xff]
        %v1595 = vld [vmem:[%s1373 + $0x151] sm:$0xff]
        %v1596 = vld [vmem:[%s1373 + $0x159] sm:$0xff]
        %v1597 = vld [vmem:[%s1373 + $0x169] sm:$0xff]
        %v1598 = vld [vmem:[%s1373 + $0x171] sm:$0xff]
        %1631 = vrot.lane.b32.xlu0 %v1567, 28
        %v1632 = vpop.permute.xlu0 %1631
        %1633 = vrot.lane.b32.xlu0 %v1568, 28
        %v1634 = vpop.permute.xlu0 %1633
        %1635 = vrot.lane.b32.xlu0 %v1569, 28
        %v1636 = vpop.permute.xlu0 %1635
        %1637 = vrot.lane.b32.xlu0 %v1570, 28
        %v1638 = vpop.permute.xlu0 %1637
        %1639 = vrot.lane.b32.xlu0 %v1571, 28
        %v1640 = vpop.permute.xlu0 %1639
        %1641 = vrot.lane.b32.xlu0 %v1572, 28
        %v1642 = vpop.permute.xlu0 %1641
        %1643 = vrot.lane.b32.xlu0 %v1573, 28
        %v1644 = vpop.permute.xlu0 %1643
        %1645 = vrot.lane.b32.xlu0 %v1574, 28
        %v1646 = vpop.permute.xlu0 %1645
        %1647 = vrot.lane.b32.xlu0 %v1575, 28
        %v1648 = vpop.permute.xlu0 %1647
        %1649 = vrot.lane.b32.xlu0 %v1576, 28
        %v1650 = vpop.permute.xlu0 %1649
        %1651 = vrot.lane.b32.xlu0 %v1577, 28
        %v1652 = vpop.permute.xlu0 %1651
        %1653 = vrot.lane.b32.xlu0 %v1578, 28
        %v1654 = vpop.permute.xlu0 %1653
        %1655 = vrot.lane.b32.xlu0 %v1579, 28
        %v1656 = vpop.permute.xlu0 %1655
        %1657 = vrot.lane.b32.xlu0 %v1580, 28
        %v1658 = vpop.permute.xlu0 %1657
        %1659 = vrot.lane.b32.xlu0 %v1581, 28
        %v1660 = vpop.permute.xlu0 %1659
        %1661 = vrot.lane.b32.xlu0 %v1582, 28
        %v1662 = vpop.permute.xlu0 %1661
        %1663 = vrot.lane.b32.xlu0 %v1583, 28
        %v1664 = vpop.permute.xlu0 %1663
        %1665 = vrot.lane.b32.xlu0 %v1584, 28
        %v1666 = vpop.permute.xlu0 %1665
        %1667 = vrot.lane.b32.xlu0 %v1585, 28
        %v1668 = vpop.permute.xlu0 %1667
        %1669 = vrot.lane.b32.xlu0 %v1586, 28
        %v1670 = vpop.permute.xlu0 %1669
        %1671 = vrot.lane.b32.xlu0 %v1587, 28
        %v1672 = vpop.permute.xlu0 %1671
        %1673 = vrot.lane.b32.xlu0 %v1588, 28
        %v1674 = vpop.permute.xlu0 %1673
        %1675 = vrot.lane.b32.xlu0 %v1589, 28
        %v1676 = vpop.permute.xlu0 %1675
        %1677 = vrot.lane.b32.xlu0 %v1590, 28
        %v1678 = vpop.permute.xlu0 %1677
        %1679 = vrot.lane.b32.xlu0 %v1591, 28
        %v1680 = vpop.permute.xlu0 %1679
        %1681 = vrot.lane.b32.xlu0 %v1592, 28
        %v1682 = vpop.permute.xlu0 %1681
        %1683 = vrot.lane.b32.xlu0 %v1593, 28
        %v1684 = vpop.permute.xlu0 %1683
        %1685 = vrot.lane.b32.xlu0 %v1594, 28
        %v1686 = vpop.permute.xlu0 %1685
        %1687 = vrot.lane.b32.xlu0 %v1595, 28
        %v1688 = vpop.permute.xlu0 %1687
        %1689 = vrot.lane.b32.xlu0 %v1596, 28
        %v1690 = vpop.permute.xlu0 %1689
        %1691 = vrot.lane.b32.xlu0 %v1597, 28
        %v1692 = vpop.permute.xlu0 %1691
        %1693 = vrot.lane.b32.xlu0 %v1598, 28
        %v1694 = vpop.permute.xlu0 %1693
        %vm1727 = vcmask 261344
        %1728 = vst.msk [vmem:[#allocation3] sm:$0xff] %vm1727, %v1632
        %1729 = vst.msk [vmem:[#allocation3 + $0x8] sm:$0xff] %vm1727, %v1634
        %1730 = vst.msk [vmem:[#allocation3 + $0x10] sm:$0xff] %vm1727, %v1636
        %1731 = vst.msk [vmem:[#allocation3 + $0x18] sm:$0xff] %vm1727, %v1638
        %1732 = vst.msk [vmem:[#allocation3 + $0x20] sm:$0xff] %vm1727, %v1640
        %1733 = vst.msk [vmem:[#allocation3 + $0x28] sm:$0xff] %vm1727, %v1642
        %1734 = vst.msk [vmem:[#allocation3 + $0x30] sm:$0xff] %vm1727, %v1644
        %1735 = vst.msk [vmem:[#allocation3 + $0x38] sm:$0xff] %vm1727, %v1646
        %1736 = vst.msk [vmem:[#allocation3 + $0x40] sm:$0xff] %vm1727, %v1648
        %1737 = vst.msk [vmem:[#allocation3 + $0x48] sm:$0xff] %vm1727, %v1650
        %1738 = vst.msk [vmem:[#allocation3 + $0x50] sm:$0xff] %vm1727, %v1652
        %1739 = vst.msk [vmem:[#allocation3 + $0x58] sm:$0xff] %vm1727, %v1654
        %1740 = vst.msk [vmem:[#allocation3 + $0x60] sm:$0xff] %vm1727, %v1656
        %1741 = vst.msk [vmem:[#allocation3 + $0x68] sm:$0xff] %vm1727, %v1658
        %1742 = vst.msk [vmem:[#allocation3 + $0x70] sm:$0xff] %vm1727, %v1660
        %1743 = vst.msk [vmem:[#allocation3 + $0x78] sm:$0xff] %vm1727, %v1662
        %1744 = vst.msk [vmem:[#allocation3 + $0x80] sm:$0xff] %vm1727, %v1664
        %1745 = vst.msk [vmem:[#allocation3 + $0x88] sm:$0xff] %vm1727, %v1666
        %1746 = vst.msk [vmem:[#allocation3 + $0x90] sm:$0xff] %vm1727, %v1668
        %1747 = vst.msk [vmem:[#allocation3 + $0x98] sm:$0xff] %vm1727, %v1670
        %1748 = vst.msk [vmem:[#allocation3 + $0xa0] sm:$0xff] %vm1727, %v1672
        %1749 = vst.msk [vmem:[#allocation3 + $0xa8] sm:$0xff] %vm1727, %v1674
        %1750 = vst.msk [vmem:[#allocation3 + $0xb0] sm:$0xff] %vm1727, %v1676
        %1751 = vst.msk [vmem:[#allocation3 + $0xb8] sm:$0xff] %vm1727, %v1678
        %1752 = vst.msk [vmem:[#allocation3 + $0xc0] sm:$0xff] %vm1727, %v1680
        %1753 = vst.msk [vmem:[#allocation3 + $0xc8] sm:$0xff] %vm1727, %v1682
        %1754 = vst.msk [vmem:[#allocation3 + $0xd0] sm:$0xff] %vm1727, %v1684
        %1755 = vst.msk [vmem:[#allocation3 + $0xd8] sm:$0xff] %vm1727, %v1686
        %1756 = vst.msk [vmem:[#allocation3 + $0xe0] sm:$0xff] %vm1727, %v1688
        %1757 = vst.msk [vmem:[#allocation3 + $0xe8] sm:$0xff] %vm1727, %v1690
        %1758 = vst.msk [vmem:[#allocation3 + $0xf0] sm:$0xff] %vm1727, %v1692
        %1759 = vst.msk [vmem:[#allocation3 + $0xf8] sm:$0xff] %vm1727, %v1694
        %v1760 = vld [vmem:[%s1373 + $0x2] sm:$0xff]
        %v1761 = vld [vmem:[%s1373 + $0xa] sm:$0xff]
        %v1762 = vld [vmem:[%s1373 + $0x1a] sm:$0xff]
        %v1763 = vld [vmem:[%s1373 + $0x22] sm:$0xff]
        %v1764 = vld [vmem:[%s1373 + $0x32] sm:$0xff]
        %v1765 = vld [vmem:[%s1373 + $0x3a] sm:$0xff]
        %v1766 = vld [vmem:[%s1373 + $0x4a] sm:$0xff]
        %v1767 = vld [vmem:[%s1373 + $0x52] sm:$0xff]
        %v1768 = vld [vmem:[%s1373 + $0x62] sm:$0xff]
        %v1769 = vld [vmem:[%s1373 + $0x6a] sm:$0xff]
        %v1770 = vld [vmem:[%s1373 + $0x7a] sm:$0xff]
        %v1771 = vld [vmem:[%s1373 + $0x82] sm:$0xff]
        %v1772 = vld [vmem:[%s1373 + $0x92] sm:$0xff]
        %v1773 = vld [vmem:[%s1373 + $0x9a] sm:$0xff]
        %v1774 = vld [vmem:[%s1373 + $0xaa] sm:$0xff]
        %v1775 = vld [vmem:[%s1373 + $0xb2] sm:$0xff]
        %v1776 = vld [vmem:[%s1373 + $0xc2] sm:$0xff]
        %v1777 = vld [vmem:[%s1373 + $0xca] sm:$0xff]
        %v1778 = vld [vmem:[%s1373 + $0xda] sm:$0xff]
        %v1779 = vld [vmem:[%s1373 + $0xe2] sm:$0xff]
        %v1780 = vld [vmem:[%s1373 + $0xf2] sm:$0xff]
        %v1781 = vld [vmem:[%s1373 + $0xfa] sm:$0xff]
        %v1782 = vld [vmem:[%s1373 + $0x10a] sm:$0xff]
        %v1783 = vld [vmem:[%s1373 + $0x112] sm:$0xff]
        %v1784 = vld [vmem:[%s1373 + $0x122] sm:$0xff]
        %v1785 = vld [vmem:[%s1373 + $0x12a] sm:$0xff]
        %v1786 = vld [vmem:[%s1373 + $0x13a] sm:$0xff]
        %v1787 = vld [vmem:[%s1373 + $0x142] sm:$0xff]
        %v1788 = vld [vmem:[%s1373 + $0x152] sm:$0xff]
        %v1789 = vld [vmem:[%s1373 + $0x15a] sm:$0xff]
        %v1790 = vld [vmem:[%s1373 + $0x16a] sm:$0xff]
        %v1791 = vld [vmem:[%s1373 + $0x172] sm:$0xff]
        %1824 = vrot.lane.b32.xlu0 %v1760, 32
        %v1825 = vpop.permute.xlu0 %1824
        %1826 = vrot.lane.b32.xlu0 %v1761, 32
        %v1827 = vpop.permute.xlu0 %1826
        %1828 = vrot.lane.b32.xlu0 %v1762, 32
        %v1829 = vpop.permute.xlu0 %1828
        %1830 = vrot.lane.b32.xlu0 %v1763, 32
        %v1831 = vpop.permute.xlu0 %1830
        %1832 = vrot.lane.b32.xlu0 %v1764, 32
        %v1833 = vpop.permute.xlu0 %1832
        %1834 = vrot.lane.b32.xlu0 %v1765, 32
        %v1835 = vpop.permute.xlu0 %1834
        %1836 = vrot.lane.b32.xlu0 %v1766, 32
        %v1837 = vpop.permute.xlu0 %1836
        %1838 = vrot.lane.b32.xlu0 %v1767, 32
        %v1839 = vpop.permute.xlu0 %1838
        %1840 = vrot.lane.b32.xlu0 %v1768, 32
        %v1841 = vpop.permute.xlu0 %1840
        %1842 = vrot.lane.b32.xlu0 %v1769, 32
        %v1843 = vpop.permute.xlu0 %1842
        %1844 = vrot.lane.b32.xlu0 %v1770, 32
        %v1845 = vpop.permute.xlu0 %1844
        %1846 = vrot.lane.b32.xlu0 %v1771, 32
        %v1847 = vpop.permute.xlu0 %1846
        %1848 = vrot.lane.b32.xlu0 %v1772, 32
        %v1849 = vpop.permute.xlu0 %1848
        %1850 = vrot.lane.b32.xlu0 %v1773, 32
        %v1851 = vpop.permute.xlu0 %1850
        %1852 = vrot.lane.b32.xlu0 %v1774, 32
        %v1853 = vpop.permute.xlu0 %1852
        %1854 = vrot.lane.b32.xlu0 %v1775, 32
        %v1855 = vpop.permute.xlu0 %1854
        %1856 = vrot.lane.b32.xlu0 %v1776, 32
        %v1857 = vpop.permute.xlu0 %1856
        %1858 = vrot.lane.b32.xlu0 %v1777, 32
        %v1859 = vpop.permute.xlu0 %1858
        %1860 = vrot.lane.b32.xlu0 %v1778, 32
        %v1861 = vpop.permute.xlu0 %1860
        %1862 = vrot.lane.b32.xlu0 %v1779, 32
        %v1863 = vpop.permute.xlu0 %1862
        %1864 = vrot.lane.b32.xlu0 %v1780, 32
        %v1865 = vpop.permute.xlu0 %1864
        %1866 = vrot.lane.b32.xlu0 %v1781, 32
        %v1867 = vpop.permute.xlu0 %1866
        %1868 = vrot.lane.b32.xlu0 %v1782, 32
        %v1869 = vpop.permute.xlu0 %1868
        %1870 = vrot.lane.b32.xlu0 %v1783, 32
        %v1871 = vpop.permute.xlu0 %1870
        %1872 = vrot.lane.b32.xlu0 %v1784, 32
        %v1873 = vpop.permute.xlu0 %1872
        %1874 = vrot.lane.b32.xlu0 %v1785, 32
        %v1875 = vpop.permute.xlu0 %1874
        %1876 = vrot.lane.b32.xlu0 %v1786, 32
        %v1877 = vpop.permute.xlu0 %1876
        %1878 = vrot.lane.b32.xlu0 %v1787, 32
        %v1879 = vpop.permute.xlu0 %1878
        %1880 = vrot.lane.b32.xlu0 %v1788, 32
        %v1881 = vpop.permute.xlu0 %1880
        %1882 = vrot.lane.b32.xlu0 %v1789, 32
        %v1883 = vpop.permute.xlu0 %1882
        %1884 = vrot.lane.b32.xlu0 %v1790, 32
        %v1885 = vpop.permute.xlu0 %1884
        %1886 = vrot.lane.b32.xlu0 %v1791, 32
        %v1887 = vpop.permute.xlu0 %1886
        %vm1920 = vcmask 294144
        %1921 = vst.msk [vmem:[#allocation3] sm:$0xff] %vm1920, %v1825
        %1922 = vst.msk [vmem:[#allocation3 + $0x8] sm:$0xff] %vm1920, %v1827
        %1923 = vst.msk [vmem:[#allocation3 + $0x10] sm:$0xff] %vm1920, %v1829
        %1924 = vst.msk [vmem:[#allocation3 + $0x18] sm:$0xff] %vm1920, %v1831
        %1925 = vst.msk [vmem:[#allocation3 + $0x20] sm:$0xff] %vm1920, %v1833
        %1926 = vst.msk [vmem:[#allocation3 + $0x28] sm:$0xff] %vm1920, %v1835
        %1927 = vst.msk [vmem:[#allocation3 + $0x30] sm:$0xff] %vm1920, %v1837
        %1928 = vst.msk [vmem:[#allocation3 + $0x38] sm:$0xff] %vm1920, %v1839
        %1929 = vst.msk [vmem:[#allocation3 + $0x40] sm:$0xff] %vm1920, %v1841
        %1930 = vst.msk [vmem:[#allocation3 + $0x48] sm:$0xff] %vm1920, %v1843
        %1931 = vst.msk [vmem:[#allocation3 + $0x50] sm:$0xff] %vm1920, %v1845
        %1932 = vst.msk [vmem:[#allocation3 + $0x58] sm:$0xff] %vm1920, %v1847
        %1933 = vst.msk [vmem:[#allocation3 + $0x60] sm:$0xff] %vm1920, %v1849
        %1934 = vst.msk [vmem:[#allocation3 + $0x68] sm:$0xff] %vm1920, %v1851
        %1935 = vst.msk [vmem:[#allocation3 + $0x70] sm:$0xff] %vm1920, %v1853
        %1936 = vst.msk [vmem:[#allocation3 + $0x78] sm:$0xff] %vm1920, %v1855
        %1937 = vst.msk [vmem:[#allocation3 + $0x80] sm:$0xff] %vm1920, %v1857
        %1938 = vst.msk [vmem:[#allocation3 + $0x88] sm:$0xff] %vm1920, %v1859
        %1939 = vst.msk [vmem:[#allocation3 + $0x90] sm:$0xff] %vm1920, %v1861
        %1940 = vst.msk [vmem:[#allocation3 + $0x98] sm:$0xff] %vm1920, %v1863
        %1941 = vst.msk [vmem:[#allocation3 + $0xa0] sm:$0xff] %vm1920, %v1865
        %1942 = vst.msk [vmem:[#allocation3 + $0xa8] sm:$0xff] %vm1920, %v1867
        %1943 = vst.msk [vmem:[#allocation3 + $0xb0] sm:$0xff] %vm1920, %v1869
        %1944 = vst.msk [vmem:[#allocation3 + $0xb8] sm:$0xff] %vm1920, %v1871
        %1945 = vst.msk [vmem:[#allocation3 + $0xc0] sm:$0xff] %vm1920, %v1873
        %1946 = vst.msk [vmem:[#allocation3 + $0xc8] sm:$0xff] %vm1920, %v1875
        %1947 = vst.msk [vmem:[#allocation3 + $0xd0] sm:$0xff] %vm1920, %v1877
        %1948 = vst.msk [vmem:[#allocation3 + $0xd8] sm:$0xff] %vm1920, %v1879
        %1949 = vst.msk [vmem:[#allocation3 + $0xe0] sm:$0xff] %vm1920, %v1881
        %1950 = vst.msk [vmem:[#allocation3 + $0xe8] sm:$0xff] %vm1920, %v1883
        %1951 = vst.msk [vmem:[#allocation3 + $0xf0] sm:$0xff] %vm1920, %v1885
        %1952 = vst.msk [vmem:[#allocation3 + $0xf8] sm:$0xff] %vm1920, %v1887
        %v1953 = vld [vmem:[#allocation3] sm:$0xff]
        %v1954 = vld [vmem:[#allocation3 + $0x8] sm:$0xff]
        %v1955 = vld [vmem:[#allocation3 + $0x10] sm:$0xff]
        %v1956 = vld [vmem:[#allocation3 + $0x18] sm:$0xff]
        %v1957 = vld [vmem:[#allocation3 + $0x20] sm:$0xff]
        %v1958 = vld [vmem:[#allocation3 + $0x28] sm:$0xff]
        %v1959 = vld [vmem:[#allocation3 + $0x30] sm:$0xff]
        %v1960 = vld [vmem:[#allocation3 + $0x38] sm:$0xff]
        %v1961 = vld [vmem:[#allocation3 + $0x40] sm:$0xff]
        %v1962 = vld [vmem:[#allocation3 + $0x48] sm:$0xff]
        %v1963 = vld [vmem:[#allocation3 + $0x50] sm:$0xff]
        %v1964 = vld [vmem:[#allocation3 + $0x58] sm:$0xff]
        %v1965 = vld [vmem:[#allocation3 + $0x60] sm:$0xff]
        %v1966 = vld [vmem:[#allocation3 + $0x68] sm:$0xff]
        %v1967 = vld [vmem:[#allocation3 + $0x70] sm:$0xff]
        %v1968 = vld [vmem:[#allocation3 + $0x78] sm:$0xff]
        %v1969 = vld [vmem:[#allocation3 + $0x80] sm:$0xff]
        %v1970 = vld [vmem:[#allocation3 + $0x88] sm:$0xff]
        %v1971 = vld [vmem:[#allocation3 + $0x90] sm:$0xff]
        %v1972 = vld [vmem:[#allocation3 + $0x98] sm:$0xff]
        %v1973 = vld [vmem:[#allocation3 + $0xa0] sm:$0xff]
        %v1974 = vld [vmem:[#allocation3 + $0xa8] sm:$0xff]
        %v1975 = vld [vmem:[#allocation3 + $0xb0] sm:$0xff]
        %v1976 = vld [vmem:[#allocation3 + $0xb8] sm:$0xff]
        %v1977 = vld [vmem:[#allocation3 + $0xc0] sm:$0xff]
        %v1978 = vld [vmem:[#allocation3 + $0xc8] sm:$0xff]
        %v1979 = vld [vmem:[#allocation3 + $0xd0] sm:$0xff]
        %v1980 = vld [vmem:[#allocation3 + $0xd8] sm:$0xff]
        %v1981 = vld [vmem:[#allocation3 + $0xe0] sm:$0xff]
        %v1982 = vld [vmem:[#allocation3 + $0xe8] sm:$0xff]
        %v1983 = vld [vmem:[#allocation3 + $0xf0] sm:$0xff]
        %v1984 = vld [vmem:[#allocation3 + $0xf8] sm:$0xff]
        %v1985 = vpack.c.bf16 %v1954, %v1953
        %v1986 = vpack.c.bf16 %v1956, %v1955
        %v1987 = vpack.c.bf16 %v1958, %v1957
        %v1988 = vpack.c.bf16 %v1960, %v1959
        %v1989 = vpack.c.bf16 %v1962, %v1961
        %v1990 = vpack.c.bf16 %v1964, %v1963
        %v1991 = vpack.c.bf16 %v1966, %v1965
        %v1992 = vpack.c.bf16 %v1968, %v1967
        %v1993 = vpack.c.bf16 %v1970, %v1969
        %v1994 = vpack.c.bf16 %v1972, %v1971
        %v1995 = vpack.c.bf16 %v1974, %v1973
        %v1996 = vpack.c.bf16 %v1976, %v1975
        %v1997 = vpack.c.bf16 %v1978, %v1977
        %v1998 = vpack.c.bf16 %v1980, %v1979
        %v1999 = vpack.c.bf16 %v1982, %v1981
        %v2000 = vpack.c.bf16 %v1984, %v1983
        %v2001 = vld [vmem:[%s1] sm:$0xf]
        %v2002 = vld [vmem:[%s1 + $0x4] sm:$0xf]
        %v2003 = vld [vmem:[%s1 + $0x8] sm:$0xf]
        %v2004 = vld [vmem:[%s1 + $0xc] sm:$0xf]
        %v2005 = vld [vmem:[%s1 + $0x10] sm:$0x3]
        %v2006 = vld [vmem:[%s2] sm:$0x1]
        %v2008 = vlaneseq
        %v2009 = vshrl.u32 %v2008, 7
        %v2010 = vsub.s32 0, %v2009
        %v2011 = vrot.slane %v2006, %v2010
        %v2018 = vunpack.c.l.b16 %v2001
        %v2019 = vunpack.c.l.b16 %v2002
        %v2020 = vunpack.c.l.b16 %v2003
        %v2021 = vunpack.c.l.b16 %v2004
        %v2022 = vunpack.c.l.b16 %v2005
        %v2023 = vpack.c.b16 %v2019, %v2018
        %v2024 = vpack.c.b16 %v2021, %v2020
        %v2025 = vpack.c.b16 %v2022, %v2022
        %vm2028 = vcmask 293888
        %v2030 = vsel %vm2028, %v1985, 0
        %v2033 = vsel %vm2028, %v1986, 0
        %v2036 = vsel %vm2028, %v1987, 0
        %v2039 = vsel %vm2028, %v1988, 0
        %v2042 = vsel %vm2028, %v1989, 0
        %v2045 = vsel %vm2028, %v1990, 0
        %v2048 = vsel %vm2028, %v1991, 0
        %v2051 = vsel %vm2028, %v1992, 0
        %v2054 = vsel %vm2028, %v1993, 0
        %v2057 = vsel %vm2028, %v1994, 0
        %v2060 = vsel %vm2028, %v1995, 0
        %v2063 = vsel %vm2028, %v1996, 0
        %v2066 = vsel %vm2028, %v1997, 0
        %v2069 = vsel %vm2028, %v1998, 0
        %v2072 = vsel %vm2028, %v1999, 0
        %v2075 = vsel %vm2028, %v2000, 0
        %vm2077 = vcmask 1041408
        %v2079 = vsel %vm2077, %v2025, 0
        %2081 = vmatprep.subr.bf16.mxu0 0
        %2082 = vmatpush1.bf16.msra.mxu0 %v2023
        %2083 = vmatprep.subr.bf16.mxu0 0
        %2084 = vmatpush1.bf16.msra.mxu0 %v2024
        %2085 = vmatprep.subr.bf16.mxu0 0
        %2086 = vmatpush1.bf16.msra.mxu0 %v2079
        %2087 = vmatprep.subr.bf16.mxu0 0
        %2088 = vmatpush1.bf16.msra.mxu0 0
        %2089 = vmatprep.subr.bf16.mxu0 0
        %2090 = vmatpush1.bf16.msra.mxu0 0
        %2091 = vmatprep.subr.bf16.mxu0 0
        %2092 = vmatpush1.bf16.msra.mxu0 0
        %2093 = vmatprep.subr.bf16.mxu0 0
        %2094 = vmatpush1.bf16.msra.mxu0 0
        %2095 = vmatprep.subr.bf16.mxu0 0
        %2096 = vmatpush1.bf16.msra.mxu0 0
        %2097 = vmatprep.subr.bf16.mxu0 0
        %2098 = vmatpush1.bf16.msra.mxu0 0
        %2099 = vmatprep.subr.bf16.mxu0 0
        %2100 = vmatpush1.bf16.msra.mxu0 0
        %2101 = vmatprep.subr.bf16.mxu0 0
        %2102 = vmatpush1.bf16.msra.mxu0 0
        %2103 = vmatprep.subr.bf16.mxu0 0
        %2104 = vmatpush1.bf16.msra.mxu0 0
        %2105 = vmatprep.subr.bf16.mxu0 0
        %2106 = vmatpush1.bf16.msra.mxu0 0
        %2107 = vmatprep.subr.bf16.mxu0 0
        %2108 = vmatpush1.bf16.msra.mxu0 0
        %2109 = vmatprep.subr.bf16.mxu0 0
        %2110 = vmatpush1.bf16.msra.mxu0 0
        %2111 = vmatprep.subr.bf16.mxu0 0
        %2112 = vmatpush1.bf16.msra.mxu0 0
        %2113 = vmatprep.mubr.bf16.mxu0 0
        %2114 = vmatmul.mubr.bf16.gmra.mrb[0].mxu0 %v2030
        %v2115 = vpop.f32.mrb[0].mxu0
        %v2116 = vadd.f32 %v2011, %v2115
        %v2117 = vpop.f32.mrb[0].mxu0
        %v2118 = vpop.f32.mrb[0].mxu0
        %v2119 = vadd.f32 %v2011, %v2118
        %v2120 = vpop.f32.mrb[0].mxu0
        %2121 = vmatprep.mubr.bf16.mxu0 0
        %2122 = vmatmul.mubr.bf16.gmra.mrb[0].mxu0 %v2033
        %v2123 = vpop.f32.mrb[0].mxu0
        %v2124 = vadd.f32 %v2011, %v2123
        %v2125 = vpop.f32.mrb[0].mxu0
        %v2126 = vpop.f32.mrb[0].mxu0
        %v2127 = vadd.f32 %v2011, %v2126
        %v2128 = vpop.f32.mrb[0].mxu0
        %2129 = vmatprep.mubr.bf16.mxu0 0
        %2130 = vmatmul.mubr.bf16.gmra.mrb[0].mxu0 %v2036
        %v2131 = vpop.f32.mrb[0].mxu0
        %v2132 = vadd.f32 %v2011, %v2131
        %v2133 = vpop.f32.mrb[0].mxu0
        %v2134 = vpop.f32.mrb[0].mxu0
        %v2135 = vadd.f32 %v2011, %v2134
        %v2136 = vpop.f32.mrb[0].mxu0
        %2137 = vmatprep.mubr.bf16.mxu0 0
        %2138 = vmatmul.mubr.bf16.gmra.mrb[0].mxu0 %v2039
        %v2139 = vpop.f32.mrb[0].mxu0
        %v2140 = vadd.f32 %v2011, %v2139
        %v2141 = vpop.f32.mrb[0].mxu0
        %v2142 = vpop.f32.mrb[0].mxu0
        %v2143 = vadd.f32 %v2011, %v2142
        %v2144 = vpop.f32.mrb[0].mxu0
        %2145 = vmatprep.mubr.bf16.mxu0 0
        %2146 = vmatmul.mubr.bf16.gmra.mrb[0].mxu0 %v2042
        %v2147 = vpop.f32.mrb[0].mxu0
        %v2148 = vadd.f32 %v2011, %v2147
        %v2149 = vpop.f32.mrb[0].mxu0
        %v2150 = vpop.f32.mrb[0].mxu0
        %v2151 = vadd.f32 %v2011, %v2150
        %v2152 = vpop.f32.mrb[0].mxu0
        %2153 = vmatprep.mubr.bf16.mxu0 0
        %2154 = vmatmul.mubr.bf16.gmra.mrb[0].mxu0 %v2045
        %v2155 = vpop.f32.mrb[0].mxu0
        %v2156 = vadd.f32 %v2011, %v2155
        %v2157 = vpop.f32.mrb[0].mxu0
        %v2158 = vpop.f32.mrb[0].mxu0
        %v2159 = vadd.f32 %v2011, %v2158
        %v2160 = vpop.f32.mrb[0].mxu0
        %2161 = vmatprep.mubr.bf16.mxu0 0
        %2162 = vmatmul.mubr.bf16.gmra.mrb[0].mxu0 %v2048
        %v2163 = vpop.f32.mrb[0].mxu0
        %v2164 = vadd.f32 %v2011, %v2163
        %v2165 = vpop.f32.mrb[0].mxu0
        %v2166 = vpop.f32.mrb[0].mxu0
        %v2167 = vadd.f32 %v2011, %v2166
        %v2168 = vpop.f32.mrb[0].mxu0
        %2169 = vmatprep.mubr.bf16.mxu0 0
        %2170 = vmatmul.mubr.bf16.gmra.mrb[0].mxu0 %v2051
        %v2171 = vpop.f32.mrb[0].mxu0
        %v2172 = vadd.f32 %v2011, %v2171
        %v2173 = vpop.f32.mrb[0].mxu0
        %v2174 = vpop.f32.mrb[0].mxu0
        %v2175 = vadd.f32 %v2011, %v2174
        %v2176 = vpop.f32.mrb[0].mxu0
        %2177 = vmatprep.mubr.bf16.mxu0 0
        %2178 = vmatmul.mubr.bf16.gmra.mrb[0].mxu0 %v2054
        %v2179 = vpop.f32.mrb[0].mxu0
        %v2180 = vadd.f32 %v2011, %v2179
        %v2181 = vpop.f32.mrb[0].mxu0
        %v2182 = vpop.f32.mrb[0].mxu0
        %v2183 = vadd.f32 %v2011, %v2182
        %v2184 = vpop.f32.mrb[0].mxu0
        %2185 = vmatprep.mubr.bf16.mxu0 0
        %2186 = vmatmul.mubr.bf16.gmra.mrb[0].mxu0 %v2057
        %v2187 = vpop.f32.mrb[0].mxu0
        %v2188 = vadd.f32 %v2011, %v2187
        %v2189 = vpop.f32.mrb[0].mxu0
        %v2190 = vpop.f32.mrb[0].mxu0
        %v2191 = vadd.f32 %v2011, %v2190
        %v2192 = vpop.f32.mrb[0].mxu0
        %2193 = vmatprep.mubr.bf16.mxu0 0
        %2194 = vmatmul.mubr.bf16.gmra.mrb[0].mxu0 %v2060
        %v2195 = vpop.f32.mrb[0].mxu0
        %v2196 = vadd.f32 %v2011, %v2195
        %v2197 = vpop.f32.mrb[0].mxu0
        %v2198 = vpop.f32.mrb[0].mxu0
        %v2199 = vadd.f32 %v2011, %v2198
        %v2200 = vpop.f32.mrb[0].mxu0
        %2201 = vmatprep.mubr.bf16.mxu0 0
        %2202 = vmatmul.mubr.bf16.gmra.mrb[0].mxu0 %v2063
        %v2203 = vpop.f32.mrb[0].mxu0
        %v2204 = vadd.f32 %v2011, %v2203
        %v2205 = vpop.f32.mrb[0].mxu0
        %v2206 = vpop.f32.mrb[0].mxu0
        %v2207 = vadd.f32 %v2011, %v2206
        %v2208 = vpop.f32.mrb[0].mxu0
        %2209 = vmatprep.mubr.bf16.mxu0 0
        %2210 = vmatmul.mubr.bf16.gmra.mrb[0].mxu0 %v2066
        %v2211 = vpop.f32.mrb[0].mxu0
        %v2212 = vadd.f32 %v2011, %v2211
        %v2213 = vpop.f32.mrb[0].mxu0
        %v2214 = vpop.f32.mrb[0].mxu0
        %v2215 = vadd.f32 %v2011, %v2214
        %v2216 = vpop.f32.mrb[0].mxu0
        %2217 = vmatprep.mubr.bf16.mxu0 0
        %2218 = vmatmul.mubr.bf16.gmra.mrb[0].mxu0 %v2069
        %v2219 = vpop.f32.mrb[0].mxu0
        %v2220 = vadd.f32 %v2011, %v2219
        %v2221 = vpop.f32.mrb[0].mxu0
        %v2222 = vpop.f32.mrb[0].mxu0
        %v2223 = vadd.f32 %v2011, %v2222
        %v2224 = vpop.f32.mrb[0].mxu0
        %2225 = vmatprep.mubr.bf16.mxu0 0
        %2226 = vmatmul.mubr.bf16.gmra.mrb[0].mxu0 %v2072
        %v2227 = vpop.f32.mrb[0].mxu0
        %v2228 = vadd.f32 %v2011, %v2227
        %v2229 = vpop.f32.mrb[0].mxu0
        %v2230 = vpop.f32.mrb[0].mxu0
        %v2231 = vadd.f32 %v2011, %v2230
        %v2232 = vpop.f32.mrb[0].mxu0
        %2233 = vmatprep.mubr.bf16.mxu0 0
        %2234 = vmatmul.mubr.bf16.gmra.mrb[0].mxu0 %v2075
        %v2235 = vpop.f32.mrb[0].mxu0
        %v2236 = vadd.f32 %v2011, %v2235
        %v2237 = vpop.f32.mrb[0].mxu0
        %v2238 = vpop.f32.mrb[0].mxu0
        %v2239 = vadd.f32 %v2011, %v2238
        %v2240 = vpop.f32.mrb[0].mxu0
        %2241 = vdwg.mxu0
        %v2242 = vmax.f32 %v2116, 0.0
        %v2243 = vmax.f32 %v2119, 0.0
        %v2244 = vmax.f32 %v2124, 0.0
        %v2245 = vmax.f32 %v2127, 0.0
        %v2246 = vmax.f32 %v2132, 0.0
        %v2247 = vmax.f32 %v2135, 0.0
        %v2248 = vmax.f32 %v2140, 0.0
        %v2249 = vmax.f32 %v2143, 0.0
        %v2250 = vmax.f32 %v2148, 0.0
        %v2251 = vmax.f32 %v2151, 0.0
        %v2252 = vmax.f32 %v2156, 0.0
        %v2253 = vmax.f32 %v2159, 0.0
        %v2254 = vmax.f32 %v2164, 0.0
        %v2255 = vmax.f32 %v2167, 0.0
        %v2256 = vmax.f32 %v2172, 0.0
        %v2257 = vmax.f32 %v2175, 0.0
        %v2258 = vmax.f32 %v2180, 0.0
        %v2259 = vmax.f32 %v2183, 0.0
        %v2260 = vmax.f32 %v2188, 0.0
        %v2261 = vmax.f32 %v2191, 0.0
        %v2262 = vmax.f32 %v2196, 0.0
        %v2263 = vmax.f32 %v2199, 0.0
        %v2264 = vmax.f32 %v2204, 0.0
        %v2265 = vmax.f32 %v2207, 0.0
        %v2266 = vmax.f32 %v2212, 0.0
        %v2267 = vmax.f32 %v2215, 0.0
        %v2268 = vmax.f32 %v2220, 0.0
        %v2269 = vmax.f32 %v2223, 0.0
        %v2270 = vmax.f32 %v2228, 0.0
        %v2271 = vmax.f32 %v2231, 0.0
        %v2272 = vmax.f32 %v2236, 0.0
        %v2273 = vmax.f32 %v2239, 0.0
        %v2274 = vadd.f32 %v2242, %v2243
        %v2275 = vadd.f32 %v2274, %v2244
        %v2276 = vadd.f32 %v2275, %v2245
        %v2277 = vadd.f32 %v2276, %v2246
        %v2278 = vadd.f32 %v2277, %v2247
        %v2279 = vadd.f32 %v2278, %v2248
        %v2280 = vadd.f32 %v2279, %v2249
        %v2281 = vadd.f32 %v2280, %v2250
        %v2282 = vadd.f32 %v2281, %v2251
        %v2283 = vadd.f32 %v2282, %v2252
        %v2284 = vadd.f32 %v2283, %v2253
        %v2285 = vadd.f32 %v2284, %v2254
        %v2286 = vadd.f32 %v2285, %v2255
        %v2287 = vadd.f32 %v2286, %v2256
        %v2288 = vadd.f32 %v2287, %v2257
        %v2289 = vadd.f32 %v2288, %v2258
        %v2290 = vadd.f32 %v2289, %v2259
        %v2291 = vadd.f32 %v2290, %v2260
        %v2292 = vadd.f32 %v2291, %v2261
        %v2293 = vadd.f32 %v2292, %v2262
        %v2294 = vadd.f32 %v2293, %v2263
        %v2295 = vadd.f32 %v2294, %v2264
        %v2296 = vadd.f32 %v2295, %v2265
        %v2297 = vadd.f32 %v2296, %v2266
        %v2298 = vadd.f32 %v2297, %v2267
        %v2299 = vadd.f32 %v2298, %v2268
        %v2300 = vadd.f32 %v2299, %v2269
        %v2301 = vadd.f32 %v2300, %v2270
        %v2302 = vadd.f32 %v2301, %v2271
        %v2303 = vadd.f32 %v2302, %v2272
        %v2304 = vadd.f32 %v2303, %v2273
        %v2305 = vrot.slane %v2304, 4
        %v2306 = vadd.f32 %v2304, %v2305
        %v2307 = vrot.slane %v2306, 2
        %v2308 = vadd.f32 %v2306, %v2307
        %v2309 = vrot.slane %v2308, 1
        %v2310 = vadd.f32 %v2308, %v2309
        %v2311 = vld [vmem:[%s3] sm:$0xff]
        %v2312 = vld [vmem:[%s3 + $0x8] sm:$0xff]
        %v2313 = vld [vmem:[%s3 + $0x10] sm:$0xff]
        %v2314 = vld [vmem:[%s3 + $0x18] sm:$0xff]
        %v2315 = vld [vmem:[%s3 + $0x20] sm:$0xff]
        %v2316 = vld [vmem:[%s3 + $0x28] sm:$0xff]
        %v2317 = vld [vmem:[%s3 + $0x30] sm:$0xff]
        %v2318 = vld [vmem:[%s3 + $0x38] sm:$0xff]
        %v2319 = vld [vmem:[%s3 + $0x40] sm:$0xff]
        %v2320 = vld [vmem:[%s3 + $0x48] sm:$0xff]
        %v2321 = vld [vmem:[%s3 + $0x50] sm:$0xff]
        %v2322 = vld [vmem:[%s3 + $0x58] sm:$0xff]
        %v2323 = vld [vmem:[%s3 + $0x60] sm:$0xff]
        %v2324 = vld [vmem:[%s3 + $0x68] sm:$0xff]
        %v2325 = vld [vmem:[%s3 + $0x70] sm:$0xff]
        %v2326 = vld [vmem:[%s3 + $0x78] sm:$0xff]
        %v2327 = vld [vmem:[%s4] sm:$0x1]
        %2328 = vmatprep.subr.mxu0 0.0
        %2329 = vmatpush1.msra.mxu0 %v2311
        %2330 = vmatprep.subr.mxu0 0.0
        %2331 = vmatpush1.msra.mxu0 %v2312
        %2332 = vmatprep.subr.mxu0 0.0
        %2333 = vmatpush1.msra.mxu0 %v2313
        %2334 = vmatprep.subr.mxu0 0.0
        %2335 = vmatpush1.msra.mxu0 %v2314
        %2336 = vmatprep.subr.mxu0 0.0
        %2337 = vmatpush1.msra.mxu0 %v2315
        %2338 = vmatprep.subr.mxu0 0.0
        %2339 = vmatpush1.msra.mxu0 %v2316
        %2340 = vmatprep.subr.mxu0 0.0
        %2341 = vmatpush1.msra.mxu0 %v2317
        %2342 = vmatprep.subr.mxu0 0.0
        %2343 = vmatpush1.msra.mxu0 %v2318
        %2344 = vmatprep.subr.mxu0 0.0
        %2345 = vmatpush1.msra.mxu0 %v2319
        %2346 = vmatprep.subr.mxu0 0.0
        %2347 = vmatpush1.msra.mxu0 %v2320
        %2348 = vmatprep.subr.mxu0 0.0
        %2349 = vmatpush1.msra.mxu0 %v2321
        %2350 = vmatprep.subr.mxu0 0.0
        %2351 = vmatpush1.msra.mxu0 %v2322
        %2352 = vmatprep.subr.mxu0 0.0
        %2353 = vmatpush1.msra.mxu0 %v2323
        %2354 = vmatprep.subr.mxu0 0.0
        %2355 = vmatpush1.msra.mxu0 %v2324
        %2356 = vmatprep.subr.mxu0 0.0
        %2357 = vmatpush1.msra.mxu0 %v2325
        %2358 = vmatprep.subr.mxu0 0.0
        %2359 = vmatpush1.msra.mxu0 %v2326
        %2360 = vmatprep.subr.mxu0 0.0
        %2361 = vmatpush1.msra.mxu0 0.0
        %2362 = vmatprep.subr.mxu0 0.0
        %2363 = vmatpush1.msra.mxu0 0.0
        %2364 = vmatprep.subr.mxu0 0.0
        %2365 = vmatpush1.msra.mxu0 0.0
        %2366 = vmatprep.subr.mxu0 0.0
        %2367 = vmatpush1.msra.mxu0 0.0
        %2368 = vmatprep.subr.mxu0 0.0
        %2369 = vmatpush1.msra.mxu0 0.0
        %2370 = vmatprep.subr.mxu0 0.0
        %2371 = vmatpush1.msra.mxu0 0.0
        %2372 = vmatprep.subr.mxu0 0.0
        %2373 = vmatpush1.msra.mxu0 0.0
        %2374 = vmatprep.subr.mxu0 0.0
        %2375 = vmatpush1.msra.mxu0 0.0
        %2376 = vmatprep.subr.mxu0 0.0
        %2377 = vmatpush1.msra.mxu0 0.0
        %2378 = vmatprep.subr.mxu0 0.0
        %2379 = vmatpush1.msra.mxu0 0.0
        %2380 = vmatprep.subr.mxu0 0.0
        %2381 = vmatpush1.msra.mxu0 0.0
        %2382 = vmatprep.subr.mxu0 0.0
        %2383 = vmatpush1.msra.mxu0 0.0
        %2384 = vmatprep.subr.mxu0 0.0
        %2385 = vmatpush1.msra.mxu0 0.0
        %2386 = vmatprep.subr.mxu0 0.0
        %2387 = vmatpush1.msra.mxu0 0.0
        %2388 = vmatprep.subr.mxu0 0.0
        %2389 = vmatpush1.msra.mxu0 0.0
        %2390 = vmatprep.subr.mxu0 0.0
        %2391 = vmatpush1.msra.mxu0 0.0
        %2392 = vmatprep.mubr.f32.mxu0 0.0
        %2393 = vmatmul.mubr.f32.gmra.mrb[0].mxu0 %v2310
        %v2394 = vpop.f32.mrb[0].mxu0
        %v2395 = vadd.f32 %v2327, %v2394
        %v2396 = vpop.f32.mrb[0].mxu0
        %2397 = vdwg.mxu0
        %2398 = vst [vmem:[%s216] sm:$0x1] %v2395
        %s2399 = sand.u32 %s137, 1
        %s2400 = scalar_lea.sflag [#allocation5], %s2399
        %s2401 = sand.u32 %s137, 1
        %s2402 = scalar_lea.vmem [#allocation4], %s2401
        // Predicated region
        $region41: #{extractor_head_forward.1} parent=39 // pred_check
          %p2403 = pneg %p147
        $region42: #{extractor_head_forward.1} parent=39 // pred_check_branch
          %2405 = sbr.rel (%p2403) target = $region44
        $region43: #{extractor_head_forward.1} parent=39 // pred_region
          %s2407 = ssub.s32 16, 16
          %2408 = vsyncadd %s2400, %s2407
          %s2409 = smul.addr %s19, 16
          %s2410 = scalar_lea.hbm %s5, %s2409
          %s2412 = sshll.u32 %s2402, 4
          %s2413 = int_to_ptr.vmem [resolvable:$true] %s2412
          %2415 = dma.vmem_to_hbm [thread:$0]  %s2413, 16, %s2410, %s2400
        $region44: #{extractor_head_forward.1} parent=39 // pred_fallthru
          _
      $region40: #{extractor_head_forward.1} parent=5 // pred_fallthru
        _
      %p2416 = scmp.le.s32.totalorder 2, %s14
      // Predicated region
      $region45: #{extractor_head_forward.1} parent=5 // pred_check
        %p2417 = pneg %p2416
      $region46: #{extractor_head_forward.1} parent=5 // pred_check_branch
        %2419 = sbr.rel (%p2417) target = $region48
      $region47: #{extractor_head_forward.1} parent=5 // pred_region
        %s2420 = ssub.s32 %s14, 2
        // Predicated region
        $region49: #{extractor_head_forward.1} parent=47 // pred_check
          %p2421 = pneg %p153
        $region50: #{extractor_head_forward.1} parent=47 // pred_check_branch
          %2423 = sbr.rel (%p2421) target = $region52
        $region51: #{extractor_head_forward.1} parent=47 // pred_region
          %s2424 = sand.u32 %s138, 1
          %s2425 = scalar_lea.sflag [#allocation5], %s2424
          %s2426 = sand.u32 %s138, 1
          %s2427 = scalar_lea.vmem [#allocation4], %s2426
          %2428 = dma.done %s2425, 16
        $region52: #{extractor_head_forward.1} parent=47 // pred_fallthru
          _
      $region48: #{extractor_head_forward.1} parent=5 // pred_fallthru
        _
    $region6: #{extractor_head_forward.1} parent=1 // loop_footer
      %s18 = sadd.s32 1, %s14
    $region7: #{extractor_head_forward.1} parent=1 // loop_footer_branch
      %13 = sbr.rel target = $region3
    $region8: #{extractor_head_forward.1} parent=1 // loop_exit
      _
    %2429 = vsyncpa [#allocation5], 1
    %s2430 = scalar_lea.sflag [#allocation5], 1
    %2431 = vsyncpa %s2430, 1

</llo_original>
